<compile_context>
chip_gen: v7x
topology: tpu7x:2x2x1
jax: 0.10.0
libtpu: 0.0.40
codegen_flags: <defaults>
</compile_context>

<pallas_src>
import functools
import math

import jax
import jax.numpy as jnp
from jax import lax
from jax.experimental import pallas as pl
from jax.experimental.pallas import tpu as pltpu


# Volumes at or below this element count (<= ~24 f32 vregs) are carried as
# fori_loop values; larger ones use a VMEM scratch carry for img.
_SMALL_VOL_ELEMS = 24 * 1024


def _skeletonize_kernel(x_ref, o_ref, *scratch, num_iter, D, H, W, GW,
                        use_scratch, sk_in_out, compute_dtype):
    """Soft-skeletonize one packed (D, H, GW) block (GW = G*W packed volumes)."""
    f32 = jnp.float32
    x = x_ref[0].astype(compute_dtype)                       # (D, H, GW)

    # ---- edge masks, built once at (1, H, GW), D-broadcast at use ---------
    # Invalid +-1 neighbours along W (volume boundaries inside the packed lane
    # axis) and along H are pushed to +inf (erode) / -inf (dilate), exactly
    # matching max_pool3d's implicit padding (centre always stays in-window).
    lane = lax.broadcasted_iota(jnp.int32, (1, H, GW), 2)
    row = lax.broadcasted_iota(jnp.int32, (1, H, GW), 1)
    if (W & (W - 1)) == 0:                                    # W power of two
        wpos = lane & (W - 1)
    else:
        # floor(lane / W) via f32 division; exact for lane < 2**22 (asserted
        # in the wrapper).  Avoids integer div/rem on the VPU.
        vol_idx = jnp.floor((lane.astype(f32) + 0.5) / f32(W)).astype(jnp.int32)
        wpos = lane - vol_idx * W
    inf_c = jnp.array(jnp.inf, compute_dtype)
    zero_c = jnp.array(0, compute_dtype)
    w_hi = jnp.where(wpos == (W - 1), inf_c, zero_c)   # +1 W-shift invalid here
    w_lo = jnp.where(wpos == 0, inf_c, zero_c)         # -1 W-shift invalid here
    h_hi = jnp.where(row == (H - 1), inf_c, zero_c)
    h_lo = jnp.where(row == 0, inf_c, zero_c)

    # ---- +-1 neighbours ----------------------------------------------------
    def nbr_w(v, delta, sign):
        # jnp.roll semantics: rolled[i] = v[i - shift].
        r = pltpu.roll(v, shift=(-delta) % GW, axis=2)
        m = w_hi if delta == 1 else w_lo
        return r + m if sign > 0 else r - m

    def nbr_h(v, delta, sign):
        r = pltpu.roll(v, shift=(-delta) % H, axis=1)
        m = h_hi if delta == 1 else h_lo
        return r + m if sign > 0 else r - m

    def nbr_d(v, delta):
        # Out-of-range neighbour := centre (equivalent: centre is in-window).
        if D == 1:
            return v
        if delta == 1:
            return jnp.concatenate([v[1:], v[D - 1:D]], axis=0)
        return jnp.concatenate([v[0:1], v[:D - 1]], axis=0)

    def soft_erode(v):
        # min over {centre, z+-1, y+-1, x+-1}: 6 mins, balanced tree.
        m1 = jnp.minimum(nbr_d(v, 1), nbr_d(v, -1))
        m2 = jnp.minimum(nbr_h(v, 1, +1), nbr_h(v, -1, +1))
        m3 = jnp.minimum(jnp.minimum(nbr_w(v, 1, +1), nbr_w(v, -1, +1)), v)
        return jnp.minimum(jnp.minimum(m1, m2), m3)

    def soft_dilate(v):
        # Separable 3x3x3 max pool: 3-wide max along z, then y, then x.
        v = jnp.maximum(v, jnp.maximum(nbr_d(v, 1), nbr_d(v, -1)))
        v = jnp.maximum(v, jnp.maximum(nbr_h(v, 1, -1), nbr_h(v, -1, -1)))
        v = jnp.maximum(v, jnp.maximum(nbr_w(v, 1, -1), nbr_w(v, -1, -1)))
        return v

    def delta_of(img, eroded):
        # relu(img - dilate(erode(img))); subtraction / skeleton math in f32.
        return jnp.maximum(img.astype(f32) - soft_dilate(eroded).astype(f32),
                           0.0)

    # erode(img_i) needed by soft_open(img_i) IS img_{i+1}: one erode + one
    # dilate per iteration.  Manual unroll-by-2 of the iteration loop.
    half, odd = num_iter // 2, num_iter % 2

    if not use_scratch:
        # --- small volumes: img & skeleton are plain loop carries -----------
        e0 = soft_erode(x)
        carry = (e0, delta_of(x, e0))                 # (img, skeleton)

        def one(c):
            img, sk = c
            eroded = soft_erode(img)                  # next iteration's img
            delta = delta_of(img, eroded)
            return eroded, sk + jnp.maximum(delta - sk * delta, 0.0)

        carry = lax.fori_loop(0, half, lambda _, c: one(one(c)), carry)
        if odd:
            carry = one(carry)
        o_ref[0] = carry[1].astype(o_ref.dtype)
    else:
        # --- large volumes: img in VMEM scratch; skeleton accumulated
        # directly in the output block when the output is f32 ----------------
        img_ref = scratch[0]
        if sk_in_out:
            def sk_read():
                return o_ref[0].astype(f32)

            def sk_write(v):
                o_ref[0] = v.astype(o_ref.dtype)
        else:
            sk_ref = scratch[1]

            def sk_read():
                return sk_ref[...]

            def sk_write(v):
                sk_ref[...] = v

        e0 = soft_erode(x)
        img_ref[...] = e0
        sk_write(delta_of(x, e0))

        def one():
            img = img_ref[...]
            eroded = soft_erode(img)                  # next iteration's img
            delta = delta_of(img, eroded)
            sk = sk_read()
            sk_write(sk + jnp.maximum(delta - sk * delta, 0.0))
            img_ref[...] = eroded

        def body2(_, c):
            one()
            one()
            return c

        lax.fori_loop(0, half, body2, 0)
        if odd:
            one()
        if not sk_in_out:
            o_ref[0] = sk_ref[...].astype(o_ref.dtype)


def soft_skeletonize(img, num_iter=40, compute_dtype=jnp.float32):
    """Pallas TPU SoftSkeletonize.forward for NCDHW probability maps.

    compute_dtype=jnp.bfloat16 roughly halves the binding VALU work of the
    erode/dilate chain on v6e/v7x (skeleton accumulation stays f32); keep the
    f32 default on v5e (no bf16 VPU) or when bit-exactness vs f32 matters.
    """
    if img.ndim != 5:
        raise ValueError(
            "In SoftSkeletonize, len(img.shape) is not equal to 5. "
            f"Got {img.ndim}.")
    B, C, D, H, W = img.shape
    NV = B * C
    x = img.reshape(NV, D, H, W)

    # ---- generation-aware VMEM budget --------------------------------------
    try:
        info = pltpu.get_tpu_info()
        vmem_cap = int(getattr(info, "vmem_capacity_bytes", 0)) or (64 << 20)
    except Exception:                      # non-TPU backend / interpret mode
        vmem_cap = 64 << 20
    vmem_cap_soft = (vmem_cap * 85) // 100    # ~54 MiB (v7x) / ~108 MiB (v5e/v6e)

    isz = jnp.dtype(img.dtype).itemsize
    csz = jnp.dtype(compute_dtype).itemsize

    def block_bytes(g):
        vol = D * H * g * W
        # double-buffered in + out blocks, img scratch, f32 skeleton, and
        # ~6 volume-sized live temporaries inside erode/dilate.
        return vol * (2 * isz + 2 * isz + csz + 4 + 6 * csz)

    # ---- lane packing: GW = G*W an exact multiple of 128 (full lane density,
    # unmasked stores), shrunk only if the block would not fit VMEM.  NB == 1
    # then only happens when the packed block is <= 128 lanes wide, i.e. when
    # a second TensorCore could not help anyway; larger problems give NB >= 2
    # and the "parallel" grid axis shards them across v7x's two cores.
    G = 128 // math.gcd(W, 128)
    while G > 1 and block_bytes(G) > vmem_cap_soft:
        G = (G + 1) // 2
    # TODO(synk): if block_bytes(1) still exceeds the budget the volume needs a
    # D-split with per-iteration halo exchange (erosion propagates one voxel
    # per iteration); not implemented here.

    pad_v = (-NV) % G
    if pad_v:
        x = jnp.concatenate([x, jnp.zeros((pad_v, D, H, W), x.dtype)], axis=0)
    NB = (NV + pad_v) // G
    GW = G * W
    assert GW < (1 << 22)   # keeps the in-kernel f32 floor-div (lane % W) exact
    xp = (x.reshape(NB, G, D, H, W)
           .transpose(0, 2, 3, 1, 4)
           .reshape(NB, D, H, GW))

    use_scratch = (D * H * GW) > _SMALL_VOL_ELEMS
    sk_in_out = jnp.dtype(img.dtype) == jnp.float32
    scratch_shapes = []
    if use_scratch:
        scratch_shapes.append(pltpu.VMEM((D, H, GW), compute_dtype))    # img
        if not sk_in_out:
            scratch_shapes.append(pltpu.VMEM((D, H, GW), jnp.float32))  # skeleton

    kernel = functools.partial(
        _skeletonize_kernel, num_iter=num_iter, D=D, H=H, W=W, GW=GW,
        use_scratch=use_scratch, sk_in_out=sk_in_out,
        compute_dtype=compute_dtype)

    vmem_limit = int(min(vmem_cap_soft, max(32 << 20, block_bytes(G))))

    out = pl.pallas_call(
        kernel,
        out_shape=jax.ShapeDtypeStruct((NB, D, H, GW), img.dtype),
        grid=(NB,),
        in_specs=[pl.BlockSpec((1, D, H, GW), lambda i: (i, 0, 0, 0))],
        out_specs=pl.BlockSpec((1, D, H, GW), lambda i: (i, 0, 0, 0)),
        scratch_shapes=scratch_shapes,
        compiler_params=pltpu.CompilerParams(
            dimension_semantics=("parallel",),
            vmem_limit_bytes=vmem_limit),
    )(xp)

    out = (out.reshape(NB, D, H, G, W)
              .transpose(0, 3, 1, 2, 4)
              .reshape(NB * G, D, H, W))[:NV]
    return out.reshape(B, C, D, H, W)


# ---------------------------- pure-JAX reference ----------------------------
def _ref_erode(img):
    def neg_maxpool(v, window, pad):
        return -lax.reduce_window(-v, -jnp.inf, lax.max, window,
                                  (1, 1, 1, 1, 1), pad)

    p1 = neg_maxpool(img, (1, 1, 3, 1, 1),
                     [(0, 0), (0, 0), (1, 1), (0, 0), (0, 0)])
    p2 = neg_maxpool(img, (1, 1, 1, 3, 1),
                     [(0, 0), (0, 0), (0, 0), (1, 1), (0, 0)])
    p3 = neg_maxpool(img, (1, 1, 1, 1, 3),
                     [(0, 0), (0, 0), (0, 0), (0, 0), (1, 1)])
    return jnp.minimum(jnp.minimum(p1, p2), p3)


def _ref_dilate(img):
    return lax.reduce_window(img, -jnp.inf, lax.max, (1, 1, 3, 3, 3),
                             (1, 1, 1, 1, 1),
                             [(0, 0), (0, 0), (1, 1), (1, 1), (1, 1)])


def _ref_skeletonize(img, num_iter):
    opened = _ref_dilate(_ref_erode(img))
    sk = jnp.maximum(img - opened, 0.0)
    for _ in range(num_iter):
        img = _ref_erode(img)
        delta = jnp.maximum(img - _ref_dilate(_ref_erode(img)), 0.0)
        sk = sk + jnp.maximum(delta - sk * delta, 0.0)
    return sk
# -----------------------------------------------------------------------------


if __name__ == "__main__":
    # Case 1: small volumes -> register-carry path; 8 volumes pack to GW=128.
    B, C, D, H, W = 2, 4, 8, 16, 16
    num_iter = 10  # module default is 40; smaller keeps the self-check quick
    img1 = jax.random.uniform(jax.random.PRNGKey(0), (B, C, D, H, W),
                              dtype=jnp.float32)
    out1 = jax.block_until_ready(soft_skeletonize(img1, num_iter=num_iter))
    ref1 = _ref_skeletonize(img1, num_iter)
    assert out1.shape == img1.shape and out1.dtype == img1.dtype
    assert jnp.allclose(out1, ref1, atol=1e-5, rtol=1e-5), (
        f"case1 max_err={float(jnp.max(jnp.abs(out1 - ref1)))}")

    # Case 2: larger volume -> VMEM-scratch path, skeleton accumulated in o_ref.
    img2 = jax.random.uniform(jax.random.PRNGKey(1), (1, 1, 8, 32, 128),
                              dtype=jnp.float32)
    out2 = jax.block_until_ready(soft_skeletonize(img2, num_iter=6))
    ref2 = _ref_skeletonize(img2, 6)
    assert jnp.allclose(out2, ref2, atol=1e-5, rtol=1e-5), (
        f"case2 max_err={float(jnp.max(jnp.abs(out2 - ref2)))}")

    # Case 3: non-f32 I/O -> f32 skeleton kept in a VMEM scratch.
    img3 = jax.random.uniform(jax.random.PRNGKey(2), (1, 1, 8, 32, 128),
                              dtype=jnp.float32).astype(jnp.bfloat16)
    out3 = jax.block_until_ready(soft_skeletonize(img3, num_iter=4))
    ref3 = _ref_skeletonize(img3.astype(jnp.float32), 4)
    assert out3.dtype == jnp.bfloat16
    assert jnp.allclose(out3.astype(jnp.float32), ref3, atol=1e-2, rtol=1e-2)

    print("KERNEL_OK")
</pallas_src>

<mosaic_0001>
module attributes {stable_mosaic.version = 11 : i64} {
  func.func @_skeletonize_kernel(%arg0: i32, %arg1: memref<1x8x16x128xf32, #tpu.memory_space<vmem>>, %arg2: memref<1x8x16x128xf32, #tpu.memory_space<vmem>>) attributes {dimension_semantics = [#tpu.dimension_semantics<parallel>], iteration_bounds = array<i64: 1>, scalar_prefetch = 0 : i64, scratch_operands = 0 : i64, tpu.core_type = #tpu.core_type<tc>, window_params = [{transform_indices = @transform_0, window_bounds = array<i64: 1, 8, 16, 128>}, {transform_indices = @transform_1, window_bounds = array<i64: 1, 8, 16, 128>}]} {
    %c0 = arith.constant 0 : index
    %c0_0 = arith.constant 0 : index
    %c0_1 = arith.constant 0 : index
    %c0_2 = arith.constant 0 : index
    %0 = vector.load %arg1[%c0, %c0_0, %c0_1, %c0_2] : memref<1x8x16x128xf32, #tpu.memory_space<vmem>>, vector<1x8x16x128xf32>
    %1 = vector.shape_cast %0 : vector<1x8x16x128xf32> to vector<8x16x128xf32>
    %2 = tpu.iota {dimensions = array<i32: 2>} : vector<1x16x128xi32>
    %3 = tpu.iota {dimensions = array<i32: 1>} : vector<1x16x128xi32>
    %c15_i32 = arith.constant 15 : i32
    %4 = vector.broadcast %c15_i32 : i32 to vector<1x16x128xi32>
    %5 = arith.andi %2, %4 : vector<1x16x128xi32>
    %c15_i32_3 = arith.constant 15 : i32
    %6 = vector.broadcast %c15_i32_3 : i32 to vector<1x16x128xi32>
    %7 = arith.cmpi eq, %5, %6 : vector<1x16x128xi32>
    %cst = arith.constant 0x7F800000 : f32
    %cst_4 = arith.constant 0.000000e+00 : f32
    %8 = vector.broadcast %cst : f32 to vector<1x16x128xf32>
    %9 = vector.broadcast %cst_4 : f32 to vector<1x16x128xf32>
    %10 = arith.select %7, %8, %9 : vector<1x16x128xi1>, vector<1x16x128xf32>
    %c0_i32 = arith.constant 0 : i32
    %11 = vector.broadcast %c0_i32 : i32 to vector<1x16x128xi32>
    %12 = arith.cmpi eq, %5, %11 : vector<1x16x128xi32>
    %cst_5 = arith.constant 0x7F800000 : f32
    %cst_6 = arith.constant 0.000000e+00 : f32
    %13 = vector.broadcast %cst_5 : f32 to vector<1x16x128xf32>
    %14 = vector.broadcast %cst_6 : f32 to vector<1x16x128xf32>
    %15 = arith.select %12, %13, %14 : vector<1x16x128xi1>, vector<1x16x128xf32>
    %c15_i32_7 = arith.constant 15 : i32
    %16 = vector.broadcast %c15_i32_7 : i32 to vector<1x16x128xi32>
    %17 = arith.cmpi eq, %3, %16 : vector<1x16x128xi32>
    %cst_8 = arith.constant 0x7F800000 : f32
    %cst_9 = arith.constant 0.000000e+00 : f32
    %18 = vector.broadcast %cst_8 : f32 to vector<1x16x128xf32>
    %19 = vector.broadcast %cst_9 : f32 to vector<1x16x128xf32>
    %20 = arith.select %17, %18, %19 : vector<1x16x128xi1>, vector<1x16x128xf32>
    %c0_i32_10 = arith.constant 0 : i32
    %21 = vector.broadcast %c0_i32_10 : i32 to vector<1x16x128xi32>
    %22 = arith.cmpi eq, %3, %21 : vector<1x16x128xi32>
    %cst_11 = arith.constant 0x7F800000 : f32
    %cst_12 = arith.constant 0.000000e+00 : f32
    %23 = vector.broadcast %cst_11 : f32 to vector<1x16x128xf32>
    %24 = vector.broadcast %cst_12 : f32 to vector<1x16x128xf32>
    %25 = arith.select %22, %23, %24 : vector<1x16x128xi1>, vector<1x16x128xf32>
    %26 = vector.extract_strided_slice %1 {offsets = [1, 0, 0], sizes = [7, 16, 128], strides = [1, 1, 1]} : vector<8x16x128xf32> to vector<7x16x128xf32>
    %27 = vector.extract_strided_slice %1 {offsets = [7, 0, 0], sizes = [1, 16, 128], strides = [1, 1, 1]} : vector<8x16x128xf32> to vector<1x16x128xf32>
    %28 = tpu.concatenate %26, %27 in 0 : vector<7x16x128xf32>, vector<1x16x128xf32> -> vector<8x16x128xf32>
    %29 = vector.extract_strided_slice %1 {offsets = [0, 0, 0], sizes = [1, 16, 128], strides = [1, 1, 1]} : vector<8x16x128xf32> to vector<1x16x128xf32>
    %30 = vector.extract_strided_slice %1 {offsets = [0, 0, 0], sizes = [7, 16, 128], strides = [1, 1, 1]} : vector<8x16x128xf32> to vector<7x16x128xf32>
    %31 = tpu.concatenate %29, %30 in 0 : vector<1x16x128xf32>, vector<7x16x128xf32> -> vector<8x16x128xf32>
    %32 = arith.minimumf %28, %31 : vector<8x16x128xf32>
    %c15_i32_13 = arith.constant 15 : i32
    %33 = tpu.dynamic_rotate %1 by %c15_i32_13 dim 1 : vector<8x16x128xf32>, i32 -> vector<8x16x128xf32>
    %34 = vector.broadcast %20 : vector<1x16x128xf32> to vector<8x16x128xf32>
    %35 = arith.addf %33, %34 : vector<8x16x128xf32>
    %c1_i32 = arith.constant 1 : i32
    %36 = tpu.dynamic_rotate %1 by %c1_i32 dim 1 : vector<8x16x128xf32>, i32 -> vector<8x16x128xf32>
    %37 = vector.broadcast %25 : vector<1x16x128xf32> to vector<8x16x128xf32>
    %38 = arith.addf %36, %37 : vector<8x16x128xf32>
    %39 = arith.minimumf %35, %38 : vector<8x16x128xf32>
    %c127_i32 = arith.constant 127 : i32
    %40 = tpu.dynamic_rotate %1 by %c127_i32 dim 2 : vector<8x16x128xf32>, i32 -> vector<8x16x128xf32>
    %41 = vector.broadcast %10 : vector<1x16x128xf32> to vector<8x16x128xf32>
    %42 = arith.addf %40, %41 : vector<8x16x128xf32>
    %c1_i32_14 = arith.constant 1 : i32
    %43 = tpu.dynamic_rotate %1 by %c1_i32_14 dim 2 : vector<8x16x128xf32>, i32 -> vector<8x16x128xf32>
    %44 = vector.broadcast %15 : vector<1x16x128xf32> to vector<8x16x128xf32>
    %45 = arith.addf %43, %44 : vector<8x16x128xf32>
    %46 = arith.minimumf %42, %45 : vector<8x16x128xf32>
    %47 = arith.minimumf %46, %1 : vector<8x16x128xf32>
    %48 = arith.minimumf %32, %39 : vector<8x16x128xf32>
    %49 = arith.minimumf %48, %47 : vector<8x16x128xf32>
    %50 = vector.extract_strided_slice %49 {offsets = [1, 0, 0], sizes = [7, 16, 128], strides = [1, 1, 1]} : vector<8x16x128xf32> to vector<7x16x128xf32>
    %51 = vector.extract_strided_slice %49 {offsets = [7, 0, 0], sizes = [1, 16, 128], strides = [1, 1, 1]} : vector<8x16x128xf32> to vector<1x16x128xf32>
    %52 = tpu.concatenate %50, %51 in 0 : vector<7x16x128xf32>, vector<1x16x128xf32> -> vector<8x16x128xf32>
    %53 = vector.extract_strided_slice %49 {offsets = [0, 0, 0], sizes = [1, 16, 128], strides = [1, 1, 1]} : vector<8x16x128xf32> to vector<1x16x128xf32>
    %54 = vector.extract_strided_slice %49 {offsets = [0, 0, 0], sizes = [7, 16, 128], strides = [1, 1, 1]} : vector<8x16x128xf32> to vector<7x16x128xf32>
    %55 = tpu.concatenate %53, %54 in 0 : vector<1x16x128xf32>, vector<7x16x128xf32> -> vector<8x16x128xf32>
    %56 = arith.maximumf %52, %55 : vector<8x16x128xf32>
    %57 = arith.maximumf %49, %56 : vector<8x16x128xf32>
    %c15_i32_15 = arith.constant 15 : i32
    %58 = tpu.dynamic_rotate %57 by %c15_i32_15 dim 1 : vector<8x16x128xf32>, i32 -> vector<8x16x128xf32>
    %59 = vector.broadcast %20 : vector<1x16x128xf32> to vector<8x16x128xf32>
    %60 = arith.subf %58, %59 : vector<8x16x128xf32>
    %c1_i32_16 = arith.constant 1 : i32
    %61 = tpu.dynamic_rotate %57 by %c1_i32_16 dim 1 : vector<8x16x128xf32>, i32 -> vector<8x16x128xf32>
    %62 = vector.broadcast %25 : vector<1x16x128xf32> to vector<8x16x128xf32>
    %63 = arith.subf %61, %62 : vector<8x16x128xf32>
    %64 = arith.maximumf %60, %63 : vector<8x16x128xf32>
    %65 = arith.maximumf %57, %64 : vector<8x16x128xf32>
    %c127_i32_17 = arith.constant 127 : i32
    %66 = tpu.dynamic_rotate %65 by %c127_i32_17 dim 2 : vector<8x16x128xf32>, i32 -> vector<8x16x128xf32>
    %67 = vector.broadcast %10 : vector<1x16x128xf32> to vector<8x16x128xf32>
    %68 = arith.subf %66, %67 : vector<8x16x128xf32>
    %c1_i32_18 = arith.constant 1 : i32
    %69 = tpu.dynamic_rotate %65 by %c1_i32_18 dim 2 : vector<8x16x128xf32>, i32 -> vector<8x16x128xf32>
    %70 = vector.broadcast %15 : vector<1x16x128xf32> to vector<8x16x128xf32>
    %71 = arith.subf %69, %70 : vector<8x16x128xf32>
    %72 = arith.maximumf %68, %71 : vector<8x16x128xf32>
    %73 = arith.maximumf %65, %72 : vector<8x16x128xf32>
    %74 = arith.subf %1, %73 : vector<8x16x128xf32>
    %cst_19 = arith.constant 0.000000e+00 : f32
    %75 = vector.broadcast %cst_19 : f32 to vector<8x16x128xf32>
    %76 = arith.maximumf %74, %75 : vector<8x16x128xf32>
    %c0_i32_20 = arith.constant 0 : i32
    %c5_i32 = arith.constant 5 : i32
    %77 = arith.addi %c0_i32_20, %c5_i32 : i32
    %c1_i32_21 = arith.constant 1 : i32
    %78:2 = scf.for %arg3 = %c0_i32_20 to %77 step %c1_i32_21 iter_args(%arg4 = %49, %arg5 = %76) -> (vector<8x16x128xf32>, vector<8x16x128xf32>)  : i32 {
      %82 = vector.extract_strided_slice %arg4 {offsets = [1, 0, 0], sizes = [7, 16, 128], strides = [1, 1, 1]} : vector<8x16x128xf32> to vector<7x16x128xf32>
      %83 = vector.extract_strided_slice %arg4 {offsets = [7, 0, 0], sizes = [1, 16, 128], strides = [1, 1, 1]} : vector<8x16x128xf32> to vector<1x16x128xf32>
      %84 = tpu.concatenate %82, %83 in 0 : vector<7x16x128xf32>, vector<1x16x128xf32> -> vector<8x16x128xf32>
      %85 = vector.extract_strided_slice %arg4 {offsets = [0, 0, 0], sizes = [1, 16, 128], strides = [1, 1, 1]} : vector<8x16x128xf32> to vector<1x16x128xf32>
      %86 = vector.extract_strided_slice %arg4 {offsets = [0, 0, 0], sizes = [7, 16, 128], strides = [1, 1, 1]} : vector<8x16x128xf32> to vector<7x16x128xf32>
      %87 = tpu.concatenate %85, %86 in 0 : vector<1x16x128xf32>, vector<7x16x128xf32> -> vector<8x16x128xf32>
      %88 = arith.minimumf %84, %87 : vector<8x16x128xf32>
      %c15_i32_26 = arith.constant 15 : i32
      %89 = tpu.dynamic_rotate %arg4 by %c15_i32_26 dim 1 : vector<8x16x128xf32>, i32 -> vector<8x16x128xf32>
      %90 = vector.broadcast %20 : vector<1x16x128xf32> to vector<8x16x128xf32>
      %91 = arith.addf %89, %90 : vector<8x16x128xf32>
      %c1_i32_27 = arith.constant 1 : i32
      %92 = tpu.dynamic_rotate %arg4 by %c1_i32_27 dim 1 : vector<8x16x128xf32>, i32 -> vector<8x16x128xf32>
      %93 = vector.broadcast %25 : vector<1x16x128xf32> to vector<8x16x128xf32>
      %94 = arith.addf %92, %93 : vector<8x16x128xf32>
      %95 = arith.minimumf %91, %94 : vector<8x16x128xf32>
      %c127_i32_28 = arith.constant 127 : i32
      %96 = tpu.dynamic_rotate %arg4 by %c127_i32_28 dim 2 : vector<8x16x128xf32>, i32 -> vector<8x16x128xf32>
      %97 = vector.broadcast %10 : vector<1x16x128xf32> to vector<8x16x128xf32>
      %98 = arith.addf %96, %97 : vector<8x16x128xf32>
      %c1_i32_29 = arith.constant 1 : i32
      %99 = tpu.dynamic_rotate %arg4 by %c1_i32_29 dim 2 : vector<8x16x128xf32>, i32 -> vector<8x16x128xf32>
      %100 = vector.broadcast %15 : vector<1x16x128xf32> to vector<8x16x128xf32>
      %101 = arith.addf %99, %100 : vector<8x16x128xf32>
      %102 = arith.minimumf %98, %101 : vector<8x16x128xf32>
      %103 = arith.minimumf %102, %arg4 : vector<8x16x128xf32>
      %104 = arith.minimumf %88, %95 : vector<8x16x128xf32>
      %105 = arith.minimumf %104, %103 : vector<8x16x128xf32>
      %106 = vector.extract_strided_slice %105 {offsets = [1, 0, 0], sizes = [7, 16, 128], strides = [1, 1, 1]} : vector<8x16x128xf32> to vector<7x16x128xf32>
      %107 = vector.extract_strided_slice %105 {offsets = [7, 0, 0], sizes = [1, 16, 128], strides = [1, 1, 1]} : vector<8x16x128xf32> to vector<1x16x128xf32>
      %108 = tpu.concatenate %106, %107 in 0 : vector<7x16x128xf32>, vector<1x16x128xf32> -> vector<8x16x128xf32>
      %109 = vector.extract_strided_slice %105 {offsets = [0, 0, 0], sizes = [1, 16, 128], strides = [1, 1, 1]} : vector<8x16x128xf32> to vector<1x16x128xf32>
      %110 = vector.extract_strided_slice %105 {offsets = [0, 0, 0], sizes = [7, 16, 128], strides = [1, 1, 1]} : vector<8x16x128xf32> to vector<7x16x128xf32>
      %111 = tpu.concatenate %109, %110 in 0 : vector<1x16x128xf32>, vector<7x16x128xf32> -> vector<8x16x128xf32>
      %112 = arith.maximumf %108, %111 : vector<8x16x128xf32>
      %113 = arith.maximumf %105, %112 : vector<8x16x128xf32>
      %c15_i32_30 = arith.constant 15 : i32
      %114 = tpu.dynamic_rotate %113 by %c15_i32_30 dim 1 : vector<8x16x128xf32>, i32 -> vector<8x16x128xf32>
      %115 = vector.broadcast %20 : vector<1x16x128xf32> to vector<8x16x128xf32>
      %116 = arith.subf %114, %115 : vector<8x16x128xf32>
      %c1_i32_31 = arith.constant 1 : i32
      %117 = tpu.dynamic_rotate %113 by %c1_i32_31 dim 1 : vector<8x16x128xf32>, i32 -> vector<8x16x128xf32>
      %118 = vector.broadcast %25 : vector<1x16x128xf32> to vector<8x16x128xf32>
      %119 = arith.subf %117, %118 : vector<8x16x128xf32>
      %120 = arith.maximumf %116, %119 : vector<8x16x128xf32>
      %121 = arith.maximumf %113, %120 : vector<8x16x128xf32>
      %c127_i32_32 = arith.constant 127 : i32
      %122 = tpu.dynamic_rotate %121 by %c127_i32_32 dim 2 : vector<8x16x128xf32>, i32 -> vector<8x16x128xf32>
      %123 = vector.broadcast %10 : vector<1x16x128xf32> to vector<8x16x128xf32>
      %124 = arith.subf %122, %123 : vector<8x16x128xf32>
      %c1_i32_33 = arith.constant 1 : i32
      %125 = tpu.dynamic_rotate %121 by %c1_i32_33 dim 2 : vector<8x16x128xf32>, i32 -> vector<8x16x128xf32>
      %126 = vector.broadcast %15 : vector<1x16x128xf32> to vector<8x16x128xf32>
      %127 = arith.subf %125, %126 : vector<8x16x128xf32>
      %128 = arith.maximumf %124, %127 : vector<8x16x128xf32>
      %129 = arith.maximumf %121, %128 : vector<8x16x128xf32>
      %130 = arith.subf %arg4, %129 : vector<8x16x128xf32>
      %cst_34 = arith.constant 0.000000e+00 : f32
      %131 = vector.broadcast %cst_34 : f32 to vector<8x16x128xf32>
      %132 = arith.maximumf %130, %131 : vector<8x16x128xf32>
      %133 = arith.mulf %arg5, %132 : vector<8x16x128xf32>
      %134 = arith.subf %132, %133 : vector<8x16x128xf32>
      %cst_35 = arith.constant 0.000000e+00 : f32
      %135 = vector.broadcast %cst_35 : f32 to vector<8x16x128xf32>
      %136 = arith.maximumf %134, %135 : vector<8x16x128xf32>
      %137 = arith.addf %arg5, %136 : vector<8x16x128xf32>
      %138 = vector.extract_strided_slice %105 {offsets = [1, 0, 0], sizes = [7, 16, 128], strides = [1, 1, 1]} : vector<8x16x128xf32> to vector<7x16x128xf32>
      %139 = vector.extract_strided_slice %105 {offsets = [7, 0, 0], sizes = [1, 16, 128], strides = [1, 1, 1]} : vector<8x16x128xf32> to vector<1x16x128xf32>
      %140 = tpu.concatenate %138, %139 in 0 : vector<7x16x128xf32>, vector<1x16x128xf32> -> vector<8x16x128xf32>
      %141 = vector.extract_strided_slice %105 {offsets = [0, 0, 0], sizes = [1, 16, 128], strides = [1, 1, 1]} : vector<8x16x128xf32> to vector<1x16x128xf32>
      %142 = vector.extract_strided_slice %105 {offsets = [0, 0, 0], sizes = [7, 16, 128], strides = [1, 1, 1]} : vector<8x16x128xf32> to vector<7x16x128xf32>
      %143 = tpu.concatenate %141, %142 in 0 : vector<1x16x128xf32>, vector<7x16x128xf32> -> vector<8x16x128xf32>
      %144 = arith.minimumf %140, %143 : vector<8x16x128xf32>
      %c15_i32_36 = arith.constant 15 : i32
      %145 = tpu.dynamic_rotate %105 by %c15_i32_36 dim 1 : vector<8x16x128xf32>, i32 -> vector<8x16x128xf32>
      %146 = vector.broadcast %20 : vector<1x16x128xf32> to vector<8x16x128xf32>
      %147 = arith.addf %145, %146 : vector<8x16x128xf32>
      %c1_i32_37 = arith.constant 1 : i32
      %148 = tpu.dynamic_rotate %105 by %c1_i32_37 dim 1 : vector<8x16x128xf32>, i32 -> vector<8x16x128xf32>
      %149 = vector.broadcast %25 : vector<1x16x128xf32> to vector<8x16x128xf32>
      %150 = arith.addf %148, %149 : vector<8x16x128xf32>
      %151 = arith.minimumf %147, %150 : vector<8x16x128xf32>
      %c127_i32_38 = arith.constant 127 : i32
      %152 = tpu.dynamic_rotate %105 by %c127_i32_38 dim 2 : vector<8x16x128xf32>, i32 -> vector<8x16x128xf32>
      %153 = vector.broadcast %10 : vector<1x16x128xf32> to vector<8x16x128xf32>
      %154 = arith.addf %152, %153 : vector<8x16x128xf32>
      %c1_i32_39 = arith.constant 1 : i32
      %155 = tpu.dynamic_rotate %105 by %c1_i32_39 dim 2 : vector<8x16x128xf32>, i32 -> vector<8x16x128xf32>
      %156 = vector.broadcast %15 : vector<1x16x128xf32> to vector<8x16x128xf32>
      %157 = arith.addf %155, %156 : vector<8x16x128xf32>
      %158 = arith.minimumf %154, %157 : vector<8x16x128xf32>
      %159 = arith.minimumf %158, %105 : vector<8x16x128xf32>
      %160 = arith.minimumf %144, %151 : vector<8x16x128xf32>
      %161 = arith.minimumf %160, %159 : vector<8x16x128xf32>
      %162 = vector.extract_strided_slice %161 {offsets = [1, 0, 0], sizes = [7, 16, 128], strides = [1, 1, 1]} : vector<8x16x128xf32> to vector<7x16x128xf32>
      %163 = vector.extract_strided_slice %161 {offsets = [7, 0, 0], sizes = [1, 16, 128], strides = [1, 1, 1]} : vector<8x16x128xf32> to vector<1x16x128xf32>
      %164 = tpu.concatenate %162, %163 in 0 : vector<7x16x128xf32>, vector<1x16x128xf32> -> vector<8x16x128xf32>
      %165 = vector.extract_strided_slice %161 {offsets = [0, 0, 0], sizes = [1, 16, 128], strides = [1, 1, 1]} : vector<8x16x128xf32> to vector<1x16x128xf32>
      %166 = vector.extract_strided_slice %161 {offsets = [0, 0, 0], sizes = [7, 16, 128], strides = [1, 1, 1]} : vector<8x16x128xf32> to vector<7x16x128xf32>
      %167 = tpu.concatenate %165, %166 in 0 : vector<1x16x128xf32>, vector<7x16x128xf32> -> vector<8x16x128xf32>
      %168 = arith.maximumf %164, %167 : vector<8x16x128xf32>
      %169 = arith.maximumf %161, %168 : vector<8x16x128xf32>
      %c15_i32_40 = arith.constant 15 : i32
      %170 = tpu.dynamic_rotate %169 by %c15_i32_40 dim 1 : vector<8x16x128xf32>, i32 -> vector<8x16x128xf32>
      %171 = vector.broadcast %20 : vector<1x16x128xf32> to vector<8x16x128xf32>
      %172 = arith.subf %170, %171 : vector<8x16x128xf32>
      %c1_i32_41 = arith.constant 1 : i32
      %173 = tpu.dynamic_rotate %169 by %c1_i32_41 dim 1 : vector<8x16x128xf32>, i32 -> vector<8x16x128xf32>
      %174 = vector.broadcast %25 : vector<1x16x128xf32> to vector<8x16x128xf32>
      %175 = arith.subf %173, %174 : vector<8x16x128xf32>
      %176 = arith.maximumf %172, %175 : vector<8x16x128xf32>
      %177 = arith.maximumf %169, %176 : vector<8x16x128xf32>
      %c127_i32_42 = arith.constant 127 : i32
      %178 = tpu.dynamic_rotate %177 by %c127_i32_42 dim 2 : vector<8x16x128xf32>, i32 -> vector<8x16x128xf32>
      %179 = vector.broadcast %10 : vector<1x16x128xf32> to vector<8x16x128xf32>
      %180 = arith.subf %178, %179 : vector<8x16x128xf32>
      %c1_i32_43 = arith.constant 1 : i32
      %181 = tpu.dynamic_rotate %177 by %c1_i32_43 dim 2 : vector<8x16x128xf32>, i32 -> vector<8x16x128xf32>
      %182 = vector.broadcast %15 : vector<1x16x128xf32> to vector<8x16x128xf32>
      %183 = arith.subf %181, %182 : vector<8x16x128xf32>
      %184 = arith.maximumf %180, %183 : vector<8x16x128xf32>
      %185 = arith.maximumf %177, %184 : vector<8x16x128xf32>
      %186 = arith.subf %105, %185 : vector<8x16x128xf32>
      %cst_44 = arith.constant 0.000000e+00 : f32
      %187 = vector.broadcast %cst_44 : f32 to vector<8x16x128xf32>
      %188 = arith.maximumf %186, %187 : vector<8x16x128xf32>
      %189 = arith.mulf %137, %188 : vector<8x16x128xf32>
      %190 = arith.subf %188, %189 : vector<8x16x128xf32>
      %cst_45 = arith.constant 0.000000e+00 : f32
      %191 = vector.broadcast %cst_45 : f32 to vector<8x16x128xf32>
      %192 = arith.maximumf %190, %191 : vector<8x16x128xf32>
      %193 = arith.addf %137, %192 : vector<8x16x128xf32>
      scf.yield %161, %193 : vector<8x16x128xf32>, vector<8x16x128xf32>
    }
    %c0_22 = arith.constant 0 : index
    %c0_23 = arith.constant 0 : index
    %c0_24 = arith.constant 0 : index
    %c0_25 = arith.constant 0 : index
    %79 = vector.load %arg2[%c0_22, %c0_23, %c0_24, %c0_25] : memref<1x8x16x128xf32, #tpu.memory_space<vmem>>, vector<1x8x16x128xf32>
    %80 = vector.shape_cast %79 : vector<1x8x16x128xf32> to vector<8x16x128xf32>
    %81 = vector.shape_cast %78#1 : vector<8x16x128xf32> to vector<1x8x16x128xf32>
    tpu.vector_store %arg2[%c0_22, %c0_23, %c0_24, %c0_25], %81 {strides = array<i32>} : memref<1x8x16x128xf32, #tpu.memory_space<vmem>>, vector<1x8x16x128xf32>,
    return
  }
  func.func @transform_0(%arg0: i32) -> (i32, i32, i32, i32) {
    %c0_i32 = arith.constant 0 : i32
    %c0_i32_0 = arith.constant 0 : i32
    %c0_i32_1 = arith.constant 0 : i32
    %c0_i32_2 = arith.constant 0 : i32
    return %arg0, %c0_i32, %c0_i32_0, %c0_i32_1 : i32, i32, i32, i32
  }
  func.func @transform_1(%arg0: i32) -> (i32, i32, i32, i32) {
    %c0_i32 = arith.constant 0 : i32
    %c0_i32_0 = arith.constant 0 : i32
    %c0_i32_1 = arith.constant 0 : i32
    %c0_i32_2 = arith.constant 0 : i32
    return %arg0, %c0_i32, %c0_i32_0, %c0_i32_1 : i32, i32, i32, i32
  }
}

</mosaic_0001>

<llo_original>
// kernel: tpu_custom_call.1
$region0: #{tpu_custom_call.1}
  #allocation0 [shape = 'u32[]', space=smem, size = 0x4, offset = 0x4, fixed_abs, tag = 'smem constant byte address 0x4 - core index']
  #allocation1 [shape = 'u32[144,128]{1,0:T(1,128)}', space=vmem, size = 0x12000, scoped, tag = 'internal scratch']
  %s0 = inlined_call_operand.hbm [shape: f32[1,8,16,128], index: 0, kind: input, shape index: {}]
  %s1 = inlined_call_operand.hbm [shape: f32[1,8,16,128], index: 1, kind: output, shape index: {}]
  %s2 = sld [smem:[#allocation0]]
  $region25: #{tpu_custom_call.1} parent=0
    _
  %s4 = ssub.s32 1, %s2
  %s5 = scalar_select 0, %s4, %s2
  $region1: #{tpu_custom_call.1} parent=0
    #allocation2 [shape = 'u8[65536]{0}', space=vmem, size = 0x10000, scoped, tag = 'input window, operand 0, single buffered']
    #allocation3 [shape = 's32[1]{0}', space=sflag, size = 0x4, scoped, tag = 'scoped memory for tpu_custom_call.1']
    #allocation4 [shape = 's32[1]{0}', space=sflag, size = 0x4, scoped, tag = 'scoped memory for tpu_custom_call.1']
    #allocation5 [shape = 'u8[65536]{0}', space=vmem, size = 0x10000, scoped, tag = 'output window, operand 0, single buffered']
    %6 = vsyncpa [#allocation3], 0
    %7 = vsyncpa [#allocation4], 0
    // Predicated region
    $region2: #{tpu_custom_call.1} parent=1 // pred_check
      _
    $region3: #{tpu_custom_call.1} parent=1 // pred_check_branch
      %9 = sbr.rel (0) target = $region5
    $region4: #{tpu_custom_call.1} parent=1 // pred_region
      %s11 = ssub.s32 2048, 2048
      %12 = vsyncadd [#allocation3], %s11
      %s13 = sshll.u32 [#allocation2], 4
      %s14 = int_to_ptr.vmem [resolvable:$true] %s13
      %19 = dma.hbm_to_vmem [thread:$0]  %s0, 2048, %s14, [#allocation3], 128, 128, 8
    $region5: #{tpu_custom_call.1} parent=1 // pred_fallthru
      _
    // Predicated region
    $region6: #{tpu_custom_call.1} parent=1 // pred_check
      _
    $region7: #{tpu_custom_call.1} parent=1 // pred_check_branch
      %21 = sbr.rel (0) target = $region9
    $region8: #{tpu_custom_call.1} parent=1 // pred_region
      %22 = dma.done [#allocation3], 2048
    $region9: #{tpu_custom_call.1} parent=1 // pred_fallthru
      _
    %v23 = vld [vmem:[#allocation2] sm:$0xff]
    %v24 = vld [vmem:[#allocation2 + $0x8] sm:$0xff]
    %v25 = vld [vmem:[#allocation2 + $0x10] sm:$0xff]
    %v26 = vld [vmem:[#allocation2 + $0x18] sm:$0xff]
    %v27 = vld [vmem:[#allocation2 + $0x20] sm:$0xff]
    %v28 = vld [vmem:[#allocation2 + $0x28] sm:$0xff]
    %v29 = vld [vmem:[#allocation2 + $0x30] sm:$0xff]
    %v30 = vld [vmem:[#allocation2 + $0x38] sm:$0xff]
    %v31 = vld [vmem:[#allocation2 + $0x40] sm:$0xff]
    %v32 = vld [vmem:[#allocation2 + $0x48] sm:$0xff]
    %v33 = vld [vmem:[#allocation2 + $0x50] sm:$0xff]
    %v34 = vld [vmem:[#allocation2 + $0x58] sm:$0xff]
    %v35 = vld [vmem:[#allocation2 + $0x60] sm:$0xff]
    %v36 = vld [vmem:[#allocation2 + $0x68] sm:$0xff]
    %v37 = vld [vmem:[#allocation2 + $0x70] sm:$0xff]
    %v38 = vld [vmem:[#allocation2 + $0x78] sm:$0xff]
    %v39 = vlaneseq
    %v40 = vand.u32 %v39, 127
    %v41 = vlaneseq
    %v42 = vshrl.u32 %v41, 7
    %v43 = vadd.s32 %v42, 8
    %v44 = vand.u32 %v40, 15
    %vm45 = vcmp.eq.s32.totalorder %v44, 15
    %v46 = vsel %vm45, inf, 0.0
    %vm47 = vcmp.eq.s32.totalorder %v44, 0
    %v48 = vsel %vm47, inf, 0.0
    %vm49 = vcmp.eq.s32.totalorder %v42, 15
    %vm50 = vcmp.eq.s32.totalorder %v43, 15
    %v51 = vsel %vm49, inf, 0.0
    %v52 = vsel %vm50, inf, 0.0
    %vm53 = vcmp.eq.s32.totalorder %v42, 0
    %vm54 = vcmp.eq.s32.totalorder %v43, 0
    %v55 = vsel %vm53, inf, 0.0
    %v56 = vsel %vm54, inf, 0.0
    %v57 = vmin.f32 %v25, %v23
    %v58 = vmin.f32 %v26, %v24
    %v59 = vmin.f32 %v27, %v23
    %v60 = vmin.f32 %v28, %v24
    %v61 = vmin.f32 %v29, %v25
    %v62 = vmin.f32 %v30, %v26
    %v63 = vmin.f32 %v31, %v27
    %v64 = vmin.f32 %v32, %v28
    %v65 = vmin.f32 %v33, %v29
    %v66 = vmin.f32 %v34, %v30
    %v67 = vmin.f32 %v35, %v31
    %v68 = vmin.f32 %v36, %v32
    %v69 = vmin.f32 %v37, %v33
    %v70 = vmin.f32 %v38, %v34
    %v71 = vmin.f32 %v37, %v35
    %v72 = vmin.f32 %v38, %v36
    %v73 = vrot.slane %v23, 1
    %v74 = vrot.slane %v25, 1
    %v75 = vrot.slane %v27, 1
    %v76 = vrot.slane %v29, 1
    %v77 = vrot.slane %v31, 1
    %v78 = vrot.slane %v33, 1
    %v79 = vrot.slane %v35, 1
    %v80 = vrot.slane %v37, 1
    %v81 = vrot.slane %v24, 1
    %v82 = vrot.slane %v26, 1
    %v83 = vrot.slane %v28, 1
    %v84 = vrot.slane %v30, 1
    %v85 = vrot.slane %v32, 1
    %v86 = vrot.slane %v34, 1
    %v87 = vrot.slane %v36, 1
    %v88 = vrot.slane %v38, 1
    %vm89 = vcmp.lt.s32.totalorder %v42, 7
    %v90 = vsel %vm89, %v73, %v81
    %v91 = vsel %vm89, %v74, %v82
    %v92 = vsel %vm89, %v75, %v83
    %v93 = vsel %vm89, %v76, %v84
    %v94 = vsel %vm89, %v77, %v85
    %v95 = vsel %vm89, %v78, %v86
    %v96 = vsel %vm89, %v79, %v87
    %v97 = vsel %vm89, %v80, %v88
    %v98 = vsel %vm89, %v81, %v73
    %v99 = vsel %vm89, %v82, %v74
    %v100 = vsel %vm89, %v83, %v75
    %v101 = vsel %vm89, %v84, %v76
    %v102 = vsel %vm89, %v85, %v77
    %v103 = vsel %vm89, %v86, %v78
    %v104 = vsel %vm89, %v87, %v79
    %v105 = vsel %vm89, %v88, %v80
    %v106 = vadd.f32 %v90, %v51
    %v107 = vadd.f32 %v98, %v52
    %v108 = vadd.f32 %v91, %v51
    %v109 = vadd.f32 %v99, %v52
    %v110 = vadd.f32 %v92, %v51
    %v111 = vadd.f32 %v100, %v52
    %v112 = vadd.f32 %v93, %v51
    %v113 = vadd.f32 %v101, %v52
    %v114 = vadd.f32 %v94, %v51
    %v115 = vadd.f32 %v102, %v52
    %v116 = vadd.f32 %v95, %v51
    %v117 = vadd.f32 %v103, %v52
    %v118 = vadd.f32 %v96, %v51
    %v119 = vadd.f32 %v104, %v52
    %v120 = vadd.f32 %v97, %v51
    %v121 = vadd.f32 %v105, %v52
    %v122 = vrot.slane %v23, 7
    %v123 = vrot.slane %v25, 7
    %v124 = vrot.slane %v27, 7
    %v125 = vrot.slane %v29, 7
    %v126 = vrot.slane %v31, 7
    %v127 = vrot.slane %v33, 7
    %v128 = vrot.slane %v35, 7
    %v129 = vrot.slane %v37, 7
    %v130 = vrot.slane %v24, 7
    %v131 = vrot.slane %v26, 7
    %v132 = vrot.slane %v28, 7
    %v133 = vrot.slane %v30, 7
    %v134 = vrot.slane %v32, 7
    %v135 = vrot.slane %v34, 7
    %v136 = vrot.slane %v36, 7
    %v137 = vrot.slane %v38, 7
    %vm138 = vcmp.lt.s32.totalorder %v42, 1
    %v139 = vsel %vm138, %v122, %v130
    %v140 = vsel %vm138, %v123, %v131
    %v141 = vsel %vm138, %v124, %v132
    %v142 = vsel %vm138, %v125, %v133
    %v143 = vsel %vm138, %v126, %v134
    %v144 = vsel %vm138, %v127, %v135
    %v145 = vsel %vm138, %v128, %v136
    %v146 = vsel %vm138, %v129, %v137
    %v147 = vsel %vm138, %v130, %v122
    %v148 = vsel %vm138, %v131, %v123
    %v149 = vsel %vm138, %v132, %v124
    %v150 = vsel %vm138, %v133, %v125
    %v151 = vsel %vm138, %v134, %v126
    %v152 = vsel %vm138, %v135, %v127
    %v153 = vsel %vm138, %v136, %v128
    %v154 = vsel %vm138, %v137, %v129
    %v155 = vadd.f32 %v147, %v55
    %v156 = vadd.f32 %v139, %v56
    %v157 = vadd.f32 %v148, %v55
    %v158 = vadd.f32 %v140, %v56
    %v159 = vadd.f32 %v149, %v55
    %v160 = vadd.f32 %v141, %v56
    %v161 = vadd.f32 %v150, %v55
    %v162 = vadd.f32 %v142, %v56
    %v163 = vadd.f32 %v151, %v55
    %v164 = vadd.f32 %v143, %v56
    %v165 = vadd.f32 %v152, %v55
    %v166 = vadd.f32 %v144, %v56
    %v167 = vadd.f32 %v153, %v55
    %v168 = vadd.f32 %v145, %v56
    %v169 = vadd.f32 %v154, %v55
    %v170 = vadd.f32 %v146, %v56
    %v171 = vmin.f32 %v106, %v155
    %v172 = vmin.f32 %v107, %v156
    %v173 = vmin.f32 %v108, %v157
    %v174 = vmin.f32 %v109, %v158
    %v175 = vmin.f32 %v110, %v159
    %v176 = vmin.f32 %v111, %v160
    %v177 = vmin.f32 %v112, %v161
    %v178 = vmin.f32 %v113, %v162
    %v179 = vmin.f32 %v114, %v163
    %v180 = vmin.f32 %v115, %v164
    %v181 = vmin.f32 %v116, %v165
    %v182 = vmin.f32 %v117, %v166
    %v183 = vmin.f32 %v118, %v167
    %v184 = vmin.f32 %v119, %v168
    %v185 = vmin.f32 %v120, %v169
    %v186 = vmin.f32 %v121, %v170
    %187 = vrot.lane.b32.xlu0 %v23, 127
    %v188 = vpop.permute.xlu0 %187
    %189 = vrot.lane.b32.xlu0 %v24, 127
    %v190 = vpop.permute.xlu0 %189
    %191 = vrot.lane.b32.xlu0 %v25, 127
    %v192 = vpop.permute.xlu0 %191
    %193 = vrot.lane.b32.xlu0 %v26, 127
    %v194 = vpop.permute.xlu0 %193
    %195 = vrot.lane.b32.xlu0 %v27, 127
    %v196 = vpop.permute.xlu0 %195
    %197 = vrot.lane.b32.xlu0 %v28, 127
    %v198 = vpop.permute.xlu0 %197
    %199 = vrot.lane.b32.xlu0 %v29, 127
    %v200 = vpop.permute.xlu0 %199
    %201 = vrot.lane.b32.xlu0 %v30, 127
    %v202 = vpop.permute.xlu0 %201
    %203 = vrot.lane.b32.xlu0 %v31, 127
    %v204 = vpop.permute.xlu0 %203
    %205 = vrot.lane.b32.xlu0 %v32, 127
    %v206 = vpop.permute.xlu0 %205
    %207 = vrot.lane.b32.xlu0 %v33, 127
    %v208 = vpop.permute.xlu0 %207
    %209 = vrot.lane.b32.xlu0 %v34, 127
    %v210 = vpop.permute.xlu0 %209
    %211 = vrot.lane.b32.xlu0 %v35, 127
    %v212 = vpop.permute.xlu0 %211
    %213 = vrot.lane.b32.xlu0 %v36, 127
    %v214 = vpop.permute.xlu0 %213
    %215 = vrot.lane.b32.xlu0 %v37, 127
    %v216 = vpop.permute.xlu0 %215
    %217 = vrot.lane.b32.xlu0 %v38, 127
    %v218 = vpop.permute.xlu0 %217
    %v219 = vadd.f32 %v188, %v46
    %v220 = vadd.f32 %v190, %v46
    %v221 = vadd.f32 %v192, %v46
    %v222 = vadd.f32 %v194, %v46
    %v223 = vadd.f32 %v196, %v46
    %v224 = vadd.f32 %v198, %v46
    %v225 = vadd.f32 %v200, %v46
    %v226 = vadd.f32 %v202, %v46
    %v227 = vadd.f32 %v204, %v46
    %v228 = vadd.f32 %v206, %v46
    %v229 = vadd.f32 %v208, %v46
    %v230 = vadd.f32 %v210, %v46
    %v231 = vadd.f32 %v212, %v46
    %v232 = vadd.f32 %v214, %v46
    %v233 = vadd.f32 %v216, %v46
    %v234 = vadd.f32 %v218, %v46
    %235 = vrot.lane.b32.xlu0 %v23, 1
    %v236 = vpop.permute.xlu0 %235
    %237 = vrot.lane.b32.xlu0 %v24, 1
    %v238 = vpop.permute.xlu0 %237
    %239 = vrot.lane.b32.xlu0 %v25, 1
    %v240 = vpop.permute.xlu0 %239
    %241 = vrot.lane.b32.xlu0 %v26, 1
    %v242 = vpop.permute.xlu0 %241
    %243 = vrot.lane.b32.xlu0 %v27, 1
    %v244 = vpop.permute.xlu0 %243
    %245 = vrot.lane.b32.xlu0 %v28, 1
    %v246 = vpop.permute.xlu0 %245
    %247 = vrot.lane.b32.xlu0 %v29, 1
    %v248 = vpop.permute.xlu0 %247
    %249 = vrot.lane.b32.xlu0 %v30, 1
    %v250 = vpop.permute.xlu0 %249
    %251 = vrot.lane.b32.xlu0 %v31, 1
    %v252 = vpop.permute.xlu0 %251
    %253 = vrot.lane.b32.xlu0 %v32, 1
    %v254 = vpop.permute.xlu0 %253
    %255 = vrot.lane.b32.xlu0 %v33, 1
    %v256 = vpop.permute.xlu0 %255
    %257 = vrot.lane.b32.xlu0 %v34, 1
    %v258 = vpop.permute.xlu0 %257
    %259 = vrot.lane.b32.xlu0 %v35, 1
    %v260 = vpop.permute.xlu0 %259
    %261 = vrot.lane.b32.xlu0 %v36, 1
    %v262 = vpop.permute.xlu0 %261
    %263 = vrot.lane.b32.xlu0 %v37, 1
    %v264 = vpop.permute.xlu0 %263
    %265 = vrot.lane.b32.xlu0 %v38, 1
    %v266 = vpop.permute.xlu0 %265
    %v267 = vadd.f32 %v236, %v48
    %v268 = vadd.f32 %v238, %v48
    %v269 = vadd.f32 %v240, %v48
    %v270 = vadd.f32 %v242, %v48
    %v271 = vadd.f32 %v244, %v48
    %v272 = vadd.f32 %v246, %v48
    %v273 = vadd.f32 %v248, %v48
    %v274 = vadd.f32 %v250, %v48
    %v275 = vadd.f32 %v252, %v48
    %v276 = vadd.f32 %v254, %v48
    %v277 = vadd.f32 %v256, %v48
    %v278 = vadd.f32 %v258, %v48
    %v279 = vadd.f32 %v260, %v48
    %v280 = vadd.f32 %v262, %v48
    %v281 = vadd.f32 %v264, %v48
    %v282 = vadd.f32 %v266, %v48
    %v283 = vmin.f32 %v219, %v267
    %v284 = vmin.f32 %v220, %v268
    %v285 = vmin.f32 %v221, %v269
    %v286 = vmin.f32 %v222, %v270
    %v287 = vmin.f32 %v223, %v271
    %v288 = vmin.f32 %v224, %v272
    %v289 = vmin.f32 %v225, %v273
    %v290 = vmin.f32 %v226, %v274
    %v291 = vmin.f32 %v227, %v275
    %v292 = vmin.f32 %v228, %v276
    %v293 = vmin.f32 %v229, %v277
    %v294 = vmin.f32 %v230, %v278
    %v295 = vmin.f32 %v231, %v279
    %v296 = vmin.f32 %v232, %v280
    %v297 = vmin.f32 %v233, %v281
    %v298 = vmin.f32 %v234, %v282
    %v299 = vmin.f32 %v283, %v23
    %v300 = vmin.f32 %v284, %v24
    %v301 = vmin.f32 %v285, %v25
    %v302 = vmin.f32 %v286, %v26
    %v303 = vmin.f32 %v287, %v27
    %v304 = vmin.f32 %v288, %v28
    %v305 = vmin.f32 %v289, %v29
    %v306 = vmin.f32 %v290, %v30
    %v307 = vmin.f32 %v291, %v31
    %v308 = vmin.f32 %v292, %v32
    %v309 = vmin.f32 %v293, %v33
    %v310 = vmin.f32 %v294, %v34
    %v311 = vmin.f32 %v295, %v35
    %v312 = vmin.f32 %v296, %v36
    %v313 = vmin.f32 %v297, %v37
    %v314 = vmin.f32 %v298, %v38
    %v315 = vmin.f32 %v57, %v171
    %v316 = vmin.f32 %v58, %v172
    %v317 = vmin.f32 %v59, %v173
    %v318 = vmin.f32 %v60, %v174
    %v319 = vmin.f32 %v61, %v175
    %v320 = vmin.f32 %v62, %v176
    %v321 = vmin.f32 %v63, %v177
    %v322 = vmin.f32 %v64, %v178
    %v323 = vmin.f32 %v65, %v179
    %v324 = vmin.f32 %v66, %v180
    %v325 = vmin.f32 %v67, %v181
    %v326 = vmin.f32 %v68, %v182
    %v327 = vmin.f32 %v69, %v183
    %v328 = vmin.f32 %v70, %v184
    %v329 = vmin.f32 %v71, %v185
    %v330 = vmin.f32 %v72, %v186
    %v331 = vmin.f32 %v315, %v299
    %v332 = vmin.f32 %v316, %v300
    %v333 = vmin.f32 %v317, %v301
    %v334 = vmin.f32 %v318, %v302
    %v335 = vmin.f32 %v319, %v303
    %v336 = vmin.f32 %v320, %v304
    %v337 = vmin.f32 %v321, %v305
    %v338 = vmin.f32 %v322, %v306
    %v339 = vmin.f32 %v323, %v307
    %v340 = vmin.f32 %v324, %v308
    %v341 = vmin.f32 %v325, %v309
    %v342 = vmin.f32 %v326, %v310
    %v343 = vmin.f32 %v327, %v311
    %v344 = vmin.f32 %v328, %v312
    %v345 = vmin.f32 %v329, %v313
    %v346 = vmin.f32 %v330, %v314
    %v347 = vmax.f32 %v333, %v331
    %v348 = vmax.f32 %v334, %v332
    %v349 = vmax.f32 %v335, %v331
    %v350 = vmax.f32 %v336, %v332
    %v351 = vmax.f32 %v337, %v333
    %v352 = vmax.f32 %v338, %v334
    %v353 = vmax.f32 %v339, %v335
    %v354 = vmax.f32 %v340, %v336
    %v355 = vmax.f32 %v341, %v337
    %v356 = vmax.f32 %v342, %v338
    %v357 = vmax.f32 %v343, %v339
    %v358 = vmax.f32 %v344, %v340
    %v359 = vmax.f32 %v345, %v341
    %v360 = vmax.f32 %v346, %v342
    %v361 = vmax.f32 %v345, %v343
    %v362 = vmax.f32 %v346, %v344
    %v363 = vmax.f32 %v331, %v347
    %v364 = vmax.f32 %v332, %v348
    %v365 = vmax.f32 %v333, %v349
    %v366 = vmax.f32 %v334, %v350
    %v367 = vmax.f32 %v335, %v351
    %v368 = vmax.f32 %v336, %v352
    %v369 = vmax.f32 %v337, %v353
    %v370 = vmax.f32 %v338, %v354
    %v371 = vmax.f32 %v339, %v355
    %v372 = vmax.f32 %v340, %v356
    %v373 = vmax.f32 %v341, %v357
    %v374 = vmax.f32 %v342, %v358
    %v375 = vmax.f32 %v343, %v359
    %v376 = vmax.f32 %v344, %v360
    %v377 = vmax.f32 %v345, %v361
    %v378 = vmax.f32 %v346, %v362
    %v379 = vrot.slane %v363, 1
    %v380 = vrot.slane %v365, 1
    %v381 = vrot.slane %v367, 1
    %v382 = vrot.slane %v369, 1
    %v383 = vrot.slane %v371, 1
    %v384 = vrot.slane %v373, 1
    %v385 = vrot.slane %v375, 1
    %v386 = vrot.slane %v377, 1
    %v387 = vrot.slane %v364, 1
    %v388 = vrot.slane %v366, 1
    %v389 = vrot.slane %v368, 1
    %v390 = vrot.slane %v370, 1
    %v391 = vrot.slane %v372, 1
    %v392 = vrot.slane %v374, 1
    %v393 = vrot.slane %v376, 1
    %v394 = vrot.slane %v378, 1
    %v395 = vsel %vm89, %v379, %v387
    %v396 = vsel %vm89, %v380, %v388
    %v397 = vsel %vm89, %v381, %v389
    %v398 = vsel %vm89, %v382, %v390
    %v399 = vsel %vm89, %v383, %v391
    %v400 = vsel %vm89, %v384, %v392
    %v401 = vsel %vm89, %v385, %v393
    %v402 = vsel %vm89, %v386, %v394
    %v403 = vsel %vm89, %v387, %v379
    %v404 = vsel %vm89, %v388, %v380
    %v405 = vsel %vm89, %v389, %v381
    %v406 = vsel %vm89, %v390, %v382
    %v407 = vsel %vm89, %v391, %v383
    %v408 = vsel %vm89, %v392, %v384
    %v409 = vsel %vm89, %v393, %v385
    %v410 = vsel %vm89, %v394, %v386
    %v411 = vsub.f32 %v395, %v51
    %v412 = vsub.f32 %v403, %v52
    %v413 = vsub.f32 %v396, %v51
    %v414 = vsub.f32 %v404, %v52
    %v415 = vsub.f32 %v397, %v51
    %v416 = vsub.f32 %v405, %v52
    %v417 = vsub.f32 %v398, %v51
    %v418 = vsub.f32 %v406, %v52
    %v419 = vsub.f32 %v399, %v51
    %v420 = vsub.f32 %v407, %v52
    %v421 = vsub.f32 %v400, %v51
    %v422 = vsub.f32 %v408, %v52
    %v423 = vsub.f32 %v401, %v51
    %v424 = vsub.f32 %v409, %v52
    %v425 = vsub.f32 %v402, %v51
    %v426 = vsub.f32 %v410, %v52
    %v427 = vrot.slane %v363, 7
    %v428 = vrot.slane %v365, 7
    %v429 = vrot.slane %v367, 7
    %v430 = vrot.slane %v369, 7
    %v431 = vrot.slane %v371, 7
    %v432 = vrot.slane %v373, 7
    %v433 = vrot.slane %v375, 7
    %v434 = vrot.slane %v377, 7
    %v435 = vrot.slane %v364, 7
    %v436 = vrot.slane %v366, 7
    %v437 = vrot.slane %v368, 7
    %v438 = vrot.slane %v370, 7
    %v439 = vrot.slane %v372, 7
    %v440 = vrot.slane %v374, 7
    %v441 = vrot.slane %v376, 7
    %v442 = vrot.slane %v378, 7
    %v443 = vsel %vm138, %v427, %v435
    %v444 = vsel %vm138, %v428, %v436
    %v445 = vsel %vm138, %v429, %v437
    %v446 = vsel %vm138, %v430, %v438
    %v447 = vsel %vm138, %v431, %v439
    %v448 = vsel %vm138, %v432, %v440
    %v449 = vsel %vm138, %v433, %v441
    %v450 = vsel %vm138, %v434, %v442
    %v451 = vsel %vm138, %v435, %v427
    %v452 = vsel %vm138, %v436, %v428
    %v453 = vsel %vm138, %v437, %v429
    %v454 = vsel %vm138, %v438, %v430
    %v455 = vsel %vm138, %v439, %v431
    %v456 = vsel %vm138, %v440, %v432
    %v457 = vsel %vm138, %v441, %v433
    %v458 = vsel %vm138, %v442, %v434
    %v459 = vsub.f32 %v451, %v55
    %v460 = vsub.f32 %v443, %v56
    %v461 = vsub.f32 %v452, %v55
    %v462 = vsub.f32 %v444, %v56
    %v463 = vsub.f32 %v453, %v55
    %v464 = vsub.f32 %v445, %v56
    %v465 = vsub.f32 %v454, %v55
    %v466 = vsub.f32 %v446, %v56
    %v467 = vsub.f32 %v455, %v55
    %v468 = vsub.f32 %v447, %v56
    %v469 = vsub.f32 %v456, %v55
    %v470 = vsub.f32 %v448, %v56
    %v471 = vsub.f32 %v457, %v55
    %v472 = vsub.f32 %v449, %v56
    %v473 = vsub.f32 %v458, %v55
    %v474 = vsub.f32 %v450, %v56
    %v475 = vmax.f32 %v411, %v459
    %v476 = vmax.f32 %v412, %v460
    %v477 = vmax.f32 %v413, %v461
    %v478 = vmax.f32 %v414, %v462
    %v479 = vmax.f32 %v415, %v463
    %v480 = vmax.f32 %v416, %v464
    %v481 = vmax.f32 %v417, %v465
    %v482 = vmax.f32 %v418, %v466
    %v483 = vmax.f32 %v419, %v467
    %v484 = vmax.f32 %v420, %v468
    %v485 = vmax.f32 %v421, %v469
    %v486 = vmax.f32 %v422, %v470
    %v487 = vmax.f32 %v423, %v471
    %v488 = vmax.f32 %v424, %v472
    %v489 = vmax.f32 %v425, %v473
    %v490 = vmax.f32 %v426, %v474
    %v491 = vmax.f32 %v363, %v475
    %v492 = vmax.f32 %v364, %v476
    %v493 = vmax.f32 %v365, %v477
    %v494 = vmax.f32 %v366, %v478
    %v495 = vmax.f32 %v367, %v479
    %v496 = vmax.f32 %v368, %v480
    %v497 = vmax.f32 %v369, %v481
    %v498 = vmax.f32 %v370, %v482
    %v499 = vmax.f32 %v371, %v483
    %v500 = vmax.f32 %v372, %v484
    %v501 = vmax.f32 %v373, %v485
    %v502 = vmax.f32 %v374, %v486
    %v503 = vmax.f32 %v375, %v487
    %v504 = vmax.f32 %v376, %v488
    %v505 = vmax.f32 %v377, %v489
    %v506 = vmax.f32 %v378, %v490
    %507 = vrot.lane.b32.xlu0 %v491, 127
    %v508 = vpop.permute.xlu0 %507
    %509 = vrot.lane.b32.xlu0 %v492, 127
    %v510 = vpop.permute.xlu0 %509
    %511 = vrot.lane.b32.xlu0 %v493, 127
    %v512 = vpop.permute.xlu0 %511
    %513 = vrot.lane.b32.xlu0 %v494, 127
    %v514 = vpop.permute.xlu0 %513
    %515 = vrot.lane.b32.xlu0 %v495, 127
    %v516 = vpop.permute.xlu0 %515
    %517 = vrot.lane.b32.xlu0 %v496, 127
    %v518 = vpop.permute.xlu0 %517
    %519 = vrot.lane.b32.xlu0 %v497, 127
    %v520 = vpop.permute.xlu0 %519
    %521 = vrot.lane.b32.xlu0 %v498, 127
    %v522 = vpop.permute.xlu0 %521
    %523 = vrot.lane.b32.xlu0 %v499, 127
    %v524 = vpop.permute.xlu0 %523
    %525 = vrot.lane.b32.xlu0 %v500, 127
    %v526 = vpop.permute.xlu0 %525
    %527 = vrot.lane.b32.xlu0 %v501, 127
    %v528 = vpop.permute.xlu0 %527
    %529 = vrot.lane.b32.xlu0 %v502, 127
    %v530 = vpop.permute.xlu0 %529
    %531 = vrot.lane.b32.xlu0 %v503, 127
    %v532 = vpop.permute.xlu0 %531
    %533 = vrot.lane.b32.xlu0 %v504, 127
    %v534 = vpop.permute.xlu0 %533
    %535 = vrot.lane.b32.xlu0 %v505, 127
    %v536 = vpop.permute.xlu0 %535
    %537 = vrot.lane.b32.xlu0 %v506, 127
    %v538 = vpop.permute.xlu0 %537
    %v539 = vsub.f32 %v508, %v46
    %v540 = vsub.f32 %v510, %v46
    %v541 = vsub.f32 %v512, %v46
    %v542 = vsub.f32 %v514, %v46
    %v543 = vsub.f32 %v516, %v46
    %v544 = vsub.f32 %v518, %v46
    %v545 = vsub.f32 %v520, %v46
    %v546 = vsub.f32 %v522, %v46
    %v547 = vsub.f32 %v524, %v46
    %v548 = vsub.f32 %v526, %v46
    %v549 = vsub.f32 %v528, %v46
    %v550 = vsub.f32 %v530, %v46
    %v551 = vsub.f32 %v532, %v46
    %v552 = vsub.f32 %v534, %v46
    %v553 = vsub.f32 %v536, %v46
    %v554 = vsub.f32 %v538, %v46
    %555 = vrot.lane.b32.xlu0 %v491, 1
    %v556 = vpop.permute.xlu0 %555
    %557 = vrot.lane.b32.xlu0 %v492, 1
    %v558 = vpop.permute.xlu0 %557
    %559 = vrot.lane.b32.xlu0 %v493, 1
    %v560 = vpop.permute.xlu0 %559
    %561 = vrot.lane.b32.xlu0 %v494, 1
    %v562 = vpop.permute.xlu0 %561
    %563 = vrot.lane.b32.xlu0 %v495, 1
    %v564 = vpop.permute.xlu0 %563
    %565 = vrot.lane.b32.xlu0 %v496, 1
    %v566 = vpop.permute.xlu0 %565
    %567 = vrot.lane.b32.xlu0 %v497, 1
    %v568 = vpop.permute.xlu0 %567
    %569 = vrot.lane.b32.xlu0 %v498, 1
    %v570 = vpop.permute.xlu0 %569
    %571 = vrot.lane.b32.xlu0 %v499, 1
    %v572 = vpop.permute.xlu0 %571
    %573 = vrot.lane.b32.xlu0 %v500, 1
    %v574 = vpop.permute.xlu0 %573
    %575 = vrot.lane.b32.xlu0 %v501, 1
    %v576 = vpop.permute.xlu0 %575
    %577 = vrot.lane.b32.xlu0 %v502, 1
    %v578 = vpop.permute.xlu0 %577
    %579 = vrot.lane.b32.xlu0 %v503, 1
    %v580 = vpop.permute.xlu0 %579
    %581 = vrot.lane.b32.xlu0 %v504, 1
    %v582 = vpop.permute.xlu0 %581
    %583 = vrot.lane.b32.xlu0 %v505, 1
    %v584 = vpop.permute.xlu0 %583
    %585 = vrot.lane.b32.xlu0 %v506, 1
    %v586 = vpop.permute.xlu0 %585
    %v587 = vsub.f32 %v556, %v48
    %v588 = vsub.f32 %v558, %v48
    %v589 = vsub.f32 %v560, %v48
    %v590 = vsub.f32 %v562, %v48
    %v591 = vsub.f32 %v564, %v48
    %v592 = vsub.f32 %v566, %v48
    %v593 = vsub.f32 %v568, %v48
    %v594 = vsub.f32 %v570, %v48
    %v595 = vsub.f32 %v572, %v48
    %v596 = vsub.f32 %v574, %v48
    %v597 = vsub.f32 %v576, %v48
    %v598 = vsub.f32 %v578, %v48
    %v599 = vsub.f32 %v580, %v48
    %v600 = vsub.f32 %v582, %v48
    %v601 = vsub.f32 %v584, %v48
    %v602 = vsub.f32 %v586, %v48
    %v603 = vmax.f32 %v539, %v587
    %v604 = vmax.f32 %v540, %v588
    %v605 = vmax.f32 %v541, %v589
    %v606 = vmax.f32 %v542, %v590
    %v607 = vmax.f32 %v543, %v591
    %v608 = vmax.f32 %v544, %v592
    %v609 = vmax.f32 %v545, %v593
    %v610 = vmax.f32 %v546, %v594
    %v611 = vmax.f32 %v547, %v595
    %v612 = vmax.f32 %v548, %v596
    %v613 = vmax.f32 %v549, %v597
    %v614 = vmax.f32 %v550, %v598
    %v615 = vmax.f32 %v551, %v599
    %v616 = vmax.f32 %v552, %v600
    %v617 = vmax.f32 %v553, %v601
    %v618 = vmax.f32 %v554, %v602
    %v619 = vmax.f32 %v491, %v603
    %v620 = vmax.f32 %v492, %v604
    %v621 = vmax.f32 %v493, %v605
    %v622 = vmax.f32 %v494, %v606
    %v623 = vmax.f32 %v495, %v607
    %v624 = vmax.f32 %v496, %v608
    %v625 = vmax.f32 %v497, %v609
    %v626 = vmax.f32 %v498, %v610
    %v627 = vmax.f32 %v499, %v611
    %v628 = vmax.f32 %v500, %v612
    %v629 = vmax.f32 %v501, %v613
    %v630 = vmax.f32 %v502, %v614
    %v631 = vmax.f32 %v503, %v615
    %v632 = vmax.f32 %v504, %v616
    %v633 = vmax.f32 %v505, %v617
    %v634 = vmax.f32 %v506, %v618
    %v635 = vsub.f32 %v23, %v619
    %v636 = vsub.f32 %v24, %v620
    %v637 = vsub.f32 %v25, %v621
    %v638 = vsub.f32 %v26, %v622
    %v639 = vsub.f32 %v27, %v623
    %v640 = vsub.f32 %v28, %v624
    %v641 = vsub.f32 %v29, %v625
    %v642 = vsub.f32 %v30, %v626
    %v643 = vsub.f32 %v31, %v627
    %v644 = vsub.f32 %v32, %v628
    %v645 = vsub.f32 %v33, %v629
    %v646 = vsub.f32 %v34, %v630
    %v647 = vsub.f32 %v35, %v631
    %v648 = vsub.f32 %v36, %v632
    %v649 = vsub.f32 %v37, %v633
    %v650 = vsub.f32 %v38, %v634
    %v651 = vmax.f32 %v635, 0.0
    %v652 = vmax.f32 %v636, 0.0
    %v653 = vmax.f32 %v637, 0.0
    %v654 = vmax.f32 %v638, 0.0
    %v655 = vmax.f32 %v639, 0.0
    %v656 = vmax.f32 %v640, 0.0
    %v657 = vmax.f32 %v641, 0.0
    %v658 = vmax.f32 %v642, 0.0
    %v659 = vmax.f32 %v643, 0.0
    %v660 = vmax.f32 %v644, 0.0
    %v661 = vmax.f32 %v645, 0.0
    %v662 = vmax.f32 %v646, 0.0
    %v663 = vmax.f32 %v647, 0.0
    %v664 = vmax.f32 %v648, 0.0
    %v665 = vmax.f32 %v649, 0.0
    %v666 = vmax.f32 %v650, 0.0
    loop: start=0, step=1, limit=5
    $region10: #{tpu_custom_call.1} parent=1 // loop_pre_header
      _
    $region11: #{tpu_custom_call.1} parent=1 // loop_header
      %s668 = sphi 0, %s672
      %p669 = scmp.ge.s32.totalorder %s668, 5
      %v673 = vphi %v331, %v1649
      %v674 = vphi %v332, %v1650
      %v675 = vphi %v333, %v1651
      %v676 = vphi %v334, %v1652
      %v677 = vphi %v335, %v1653
      %v678 = vphi %v336, %v1654
      %v679 = vphi %v337, %v1655
      %v680 = vphi %v338, %v1656
      %v681 = vphi %v339, %v1657
      %v682 = vphi %v340, %v1658
      %v683 = vphi %v341, %v1659
      %v684 = vphi %v342, %v1660
      %v685 = vphi %v343, %v1661
      %v686 = vphi %v344, %v1662
      %v687 = vphi %v345, %v1663
      %v688 = vphi %v346, %v1664
      %v689 = vphi %v651, %v2033
      %v690 = vphi %v652, %v2034
      %v691 = vphi %v653, %v2035
      %v692 = vphi %v654, %v2036
      %v693 = vphi %v655, %v2037
      %v694 = vphi %v656, %v2038
      %v695 = vphi %v657, %v2039
      %v696 = vphi %v658, %v2040
      %v697 = vphi %v659, %v2041
      %v698 = vphi %v660, %v2042
      %v699 = vphi %v661, %v2043
      %v700 = vphi %v662, %v2044
      %v701 = vphi %v663, %v2045
      %v702 = vphi %v664, %v2046
      %v703 = vphi %v665, %v2047
      %v704 = vphi %v666, %v2048
    $region12: #{tpu_custom_call.1} parent=1 // loop_header_branch
      %671 = sbr.rel (%p669) target = $region16
    $region13: #{tpu_custom_call.1} parent=1 // loop_body
      %v705 = vmin.f32 %v675, %v673
      %v706 = vmin.f32 %v676, %v674
      %v707 = vmin.f32 %v677, %v673
      %v708 = vmin.f32 %v678, %v674
      %v709 = vmin.f32 %v679, %v675
      %v710 = vmin.f32 %v680, %v676
      %v711 = vmin.f32 %v681, %v677
      %v712 = vmin.f32 %v682, %v678
      %v713 = vmin.f32 %v683, %v679
      %v714 = vmin.f32 %v684, %v680
      %v715 = vmin.f32 %v685, %v681
      %v716 = vmin.f32 %v686, %v682
      %v717 = vmin.f32 %v687, %v683
      %v718 = vmin.f32 %v688, %v684
      %v719 = vmin.f32 %v687, %v685
      %v720 = vmin.f32 %v688, %v686
      %v721 = vrot.slane %v673, 1
      %v722 = vrot.slane %v675, 1
      %v723 = vrot.slane %v677, 1
      %v724 = vrot.slane %v679, 1
      %v725 = vrot.slane %v681, 1
      %v726 = vrot.slane %v683, 1
      %v727 = vrot.slane %v685, 1
      %v728 = vrot.slane %v687, 1
      %v729 = vrot.slane %v674, 1
      %v730 = vrot.slane %v676, 1
      %v731 = vrot.slane %v678, 1
      %v732 = vrot.slane %v680, 1
      %v733 = vrot.slane %v682, 1
      %v734 = vrot.slane %v684, 1
      %v735 = vrot.slane %v686, 1
      %v736 = vrot.slane %v688, 1
      %v737 = vsel %vm89, %v721, %v729
      %v738 = vsel %vm89, %v722, %v730
      %v739 = vsel %vm89, %v723, %v731
      %v740 = vsel %vm89, %v724, %v732
      %v741 = vsel %vm89, %v725, %v733
      %v742 = vsel %vm89, %v726, %v734
      %v743 = vsel %vm89, %v727, %v735
      %v744 = vsel %vm89, %v728, %v736
      %v745 = vsel %vm89, %v729, %v721
      %v746 = vsel %vm89, %v730, %v722
      %v747 = vsel %vm89, %v731, %v723
      %v748 = vsel %vm89, %v732, %v724
      %v749 = vsel %vm89, %v733, %v725
      %v750 = vsel %vm89, %v734, %v726
      %v751 = vsel %vm89, %v735, %v727
      %v752 = vsel %vm89, %v736, %v728
      %v753 = vadd.f32 %v737, %v51
      %v754 = vadd.f32 %v745, %v52
      %v755 = vadd.f32 %v738, %v51
      %v756 = vadd.f32 %v746, %v52
      %v757 = vadd.f32 %v739, %v51
      %v758 = vadd.f32 %v747, %v52
      %v759 = vadd.f32 %v740, %v51
      %v760 = vadd.f32 %v748, %v52
      %v761 = vadd.f32 %v741, %v51
      %v762 = vadd.f32 %v749, %v52
      %v763 = vadd.f32 %v742, %v51
      %v764 = vadd.f32 %v750, %v52
      %v765 = vadd.f32 %v743, %v51
      %v766 = vadd.f32 %v751, %v52
      %v767 = vadd.f32 %v744, %v51
      %v768 = vadd.f32 %v752, %v52
      %v769 = vrot.slane %v673, 7
      %v770 = vrot.slane %v675, 7
      %v771 = vrot.slane %v677, 7
      %v772 = vrot.slane %v679, 7
      %v773 = vrot.slane %v681, 7
      %v774 = vrot.slane %v683, 7
      %v775 = vrot.slane %v685, 7
      %v776 = vrot.slane %v687, 7
      %v777 = vrot.slane %v674, 7
      %v778 = vrot.slane %v676, 7
      %v779 = vrot.slane %v678, 7
      %v780 = vrot.slane %v680, 7
      %v781 = vrot.slane %v682, 7
      %v782 = vrot.slane %v684, 7
      %v783 = vrot.slane %v686, 7
      %v784 = vrot.slane %v688, 7
      %v785 = vsel %vm138, %v769, %v777
      %v786 = vsel %vm138, %v770, %v778
      %v787 = vsel %vm138, %v771, %v779
      %v788 = vsel %vm138, %v772, %v780
      %v789 = vsel %vm138, %v773, %v781
      %v790 = vsel %vm138, %v774, %v782
      %v791 = vsel %vm138, %v775, %v783
      %v792 = vsel %vm138, %v776, %v784
      %v793 = vsel %vm138, %v777, %v769
      %v794 = vsel %vm138, %v778, %v770
      %v795 = vsel %vm138, %v779, %v771
      %v796 = vsel %vm138, %v780, %v772
      %v797 = vsel %vm138, %v781, %v773
      %v798 = vsel %vm138, %v782, %v774
      %v799 = vsel %vm138, %v783, %v775
      %v800 = vsel %vm138, %v784, %v776
      %v801 = vadd.f32 %v793, %v55
      %v802 = vadd.f32 %v785, %v56
      %v803 = vadd.f32 %v794, %v55
      %v804 = vadd.f32 %v786, %v56
      %v805 = vadd.f32 %v795, %v55
      %v806 = vadd.f32 %v787, %v56
      %v807 = vadd.f32 %v796, %v55
      %v808 = vadd.f32 %v788, %v56
      %v809 = vadd.f32 %v797, %v55
      %v810 = vadd.f32 %v789, %v56
      %v811 = vadd.f32 %v798, %v55
      %v812 = vadd.f32 %v790, %v56
      %v813 = vadd.f32 %v799, %v55
      %v814 = vadd.f32 %v791, %v56
      %v815 = vadd.f32 %v800, %v55
      %v816 = vadd.f32 %v792, %v56
      %v817 = vmin.f32 %v753, %v801
      %v818 = vmin.f32 %v754, %v802
      %v819 = vmin.f32 %v755, %v803
      %v820 = vmin.f32 %v756, %v804
      %v821 = vmin.f32 %v757, %v805
      %v822 = vmin.f32 %v758, %v806
      %v823 = vmin.f32 %v759, %v807
      %v824 = vmin.f32 %v760, %v808
      %v825 = vmin.f32 %v761, %v809
      %v826 = vmin.f32 %v762, %v810
      %v827 = vmin.f32 %v763, %v811
      %v828 = vmin.f32 %v764, %v812
      %v829 = vmin.f32 %v765, %v813
      %v830 = vmin.f32 %v766, %v814
      %v831 = vmin.f32 %v767, %v815
      %v832 = vmin.f32 %v768, %v816
      %833 = vrot.lane.b32.xlu0 %v673, 127
      %v834 = vpop.permute.xlu0 %833
      %835 = vrot.lane.b32.xlu0 %v674, 127
      %v836 = vpop.permute.xlu0 %835
      %837 = vrot.lane.b32.xlu0 %v675, 127
      %v838 = vpop.permute.xlu0 %837
      %839 = vrot.lane.b32.xlu0 %v676, 127
      %v840 = vpop.permute.xlu0 %839
      %841 = vrot.lane.b32.xlu0 %v677, 127
      %v842 = vpop.permute.xlu0 %841
      %843 = vrot.lane.b32.xlu0 %v678, 127
      %v844 = vpop.permute.xlu0 %843
      %845 = vrot.lane.b32.xlu0 %v679, 127
      %v846 = vpop.permute.xlu0 %845
      %847 = vrot.lane.b32.xlu0 %v680, 127
      %v848 = vpop.permute.xlu0 %847
      %849 = vrot.lane.b32.xlu0 %v681, 127
      %v850 = vpop.permute.xlu0 %849
      %851 = vrot.lane.b32.xlu0 %v682, 127
      %v852 = vpop.permute.xlu0 %851
      %853 = vrot.lane.b32.xlu0 %v683, 127
      %v854 = vpop.permute.xlu0 %853
      %855 = vrot.lane.b32.xlu0 %v684, 127
      %v856 = vpop.permute.xlu0 %855
      %857 = vrot.lane.b32.xlu0 %v685, 127
      %v858 = vpop.permute.xlu0 %857
      %859 = vrot.lane.b32.xlu0 %v686, 127
      %v860 = vpop.permute.xlu0 %859
      %861 = vrot.lane.b32.xlu0 %v687, 127
      %v862 = vpop.permute.xlu0 %861
      %863 = vrot.lane.b32.xlu0 %v688, 127
      %v864 = vpop.permute.xlu0 %863
      %v865 = vadd.f32 %v834, %v46
      %v866 = vadd.f32 %v836, %v46
      %v867 = vadd.f32 %v838, %v46
      %v868 = vadd.f32 %v840, %v46
      %v869 = vadd.f32 %v842, %v46
      %v870 = vadd.f32 %v844, %v46
      %v871 = vadd.f32 %v846, %v46
      %v872 = vadd.f32 %v848, %v46
      %v873 = vadd.f32 %v850, %v46
      %v874 = vadd.f32 %v852, %v46
      %v875 = vadd.f32 %v854, %v46
      %v876 = vadd.f32 %v856, %v46
      %v877 = vadd.f32 %v858, %v46
      %v878 = vadd.f32 %v860, %v46
      %v879 = vadd.f32 %v862, %v46
      %v880 = vadd.f32 %v864, %v46
      %881 = vrot.lane.b32.xlu0 %v673, 1
      %v882 = vpop.permute.xlu0 %881
      %883 = vrot.lane.b32.xlu0 %v674, 1
      %v884 = vpop.permute.xlu0 %883
      %885 = vrot.lane.b32.xlu0 %v675, 1
      %v886 = vpop.permute.xlu0 %885
      %887 = vrot.lane.b32.xlu0 %v676, 1
      %v888 = vpop.permute.xlu0 %887
      %889 = vrot.lane.b32.xlu0 %v677, 1
      %v890 = vpop.permute.xlu0 %889
      %891 = vrot.lane.b32.xlu0 %v678, 1
      %v892 = vpop.permute.xlu0 %891
      %893 = vrot.lane.b32.xlu0 %v679, 1
      %v894 = vpop.permute.xlu0 %893
      %895 = vrot.lane.b32.xlu0 %v680, 1
      %v896 = vpop.permute.xlu0 %895
      %897 = vrot.lane.b32.xlu0 %v681, 1
      %v898 = vpop.permute.xlu0 %897
      %899 = vrot.lane.b32.xlu0 %v682, 1
      %v900 = vpop.permute.xlu0 %899
      %901 = vrot.lane.b32.xlu0 %v683, 1
      %v902 = vpop.permute.xlu0 %901
      %903 = vrot.lane.b32.xlu0 %v684, 1
      %v904 = vpop.permute.xlu0 %903
      %905 = vrot.lane.b32.xlu0 %v685, 1
      %v906 = vpop.permute.xlu0 %905
      %907 = vrot.lane.b32.xlu0 %v686, 1
      %v908 = vpop.permute.xlu0 %907
      %909 = vrot.lane.b32.xlu0 %v687, 1
      %v910 = vpop.permute.xlu0 %909
      %911 = vrot.lane.b32.xlu0 %v688, 1
      %v912 = vpop.permute.xlu0 %911
      %v913 = vadd.f32 %v882, %v48
      %v914 = vadd.f32 %v884, %v48
      %v915 = vadd.f32 %v886, %v48
      %v916 = vadd.f32 %v888, %v48
      %v917 = vadd.f32 %v890, %v48
      %v918 = vadd.f32 %v892, %v48
      %v919 = vadd.f32 %v894, %v48
      %v920 = vadd.f32 %v896, %v48
      %v921 = vadd.f32 %v898, %v48
      %v922 = vadd.f32 %v900, %v48
      %v923 = vadd.f32 %v902, %v48
      %v924 = vadd.f32 %v904, %v48
      %v925 = vadd.f32 %v906, %v48
      %v926 = vadd.f32 %v908, %v48
      %v927 = vadd.f32 %v910, %v48
      %v928 = vadd.f32 %v912, %v48
      %v929 = vmin.f32 %v865, %v913
      %v930 = vmin.f32 %v866, %v914
      %v931 = vmin.f32 %v867, %v915
      %v932 = vmin.f32 %v868, %v916
      %v933 = vmin.f32 %v869, %v917
      %v934 = vmin.f32 %v870, %v918
      %v935 = vmin.f32 %v871, %v919
      %v936 = vmin.f32 %v872, %v920
      %v937 = vmin.f32 %v873, %v921
      %v938 = vmin.f32 %v874, %v922
      %v939 = vmin.f32 %v875, %v923
      %v940 = vmin.f32 %v876, %v924
      %v941 = vmin.f32 %v877, %v925
      %v942 = vmin.f32 %v878, %v926
      %v943 = vmin.f32 %v879, %v927
      %v944 = vmin.f32 %v880, %v928
      %v945 = vmin.f32 %v929, %v673
      %v946 = vmin.f32 %v930, %v674
      %v947 = vmin.f32 %v931, %v675
      %v948 = vmin.f32 %v932, %v676
      %v949 = vmin.f32 %v933, %v677
      %v950 = vmin.f32 %v934, %v678
      %v951 = vmin.f32 %v935, %v679
      %v952 = vmin.f32 %v936, %v680
      %v953 = vmin.f32 %v937, %v681
      %v954 = vmin.f32 %v938, %v682
      %v955 = vmin.f32 %v939, %v683
      %v956 = vmin.f32 %v940, %v684
      %v957 = vmin.f32 %v941, %v685
      %v958 = vmin.f32 %v942, %v686
      %v959 = vmin.f32 %v943, %v687
      %v960 = vmin.f32 %v944, %v688
      %v961 = vmin.f32 %v705, %v817
      %v962 = vmin.f32 %v706, %v818
      %v963 = vmin.f32 %v707, %v819
      %v964 = vmin.f32 %v708, %v820
      %v965 = vmin.f32 %v709, %v821
      %v966 = vmin.f32 %v710, %v822
      %v967 = vmin.f32 %v711, %v823
      %v968 = vmin.f32 %v712, %v824
      %v969 = vmin.f32 %v713, %v825
      %v970 = vmin.f32 %v714, %v826
      %v971 = vmin.f32 %v715, %v827
      %v972 = vmin.f32 %v716, %v828
      %v973 = vmin.f32 %v717, %v829
      %v974 = vmin.f32 %v718, %v830
      %v975 = vmin.f32 %v719, %v831
      %v976 = vmin.f32 %v720, %v832
      %v977 = vmin.f32 %v961, %v945
      %v978 = vmin.f32 %v962, %v946
      %v979 = vmin.f32 %v963, %v947
      %v980 = vmin.f32 %v964, %v948
      %v981 = vmin.f32 %v965, %v949
      %v982 = vmin.f32 %v966, %v950
      %v983 = vmin.f32 %v967, %v951
      %v984 = vmin.f32 %v968, %v952
      %v985 = vmin.f32 %v969, %v953
      %v986 = vmin.f32 %v970, %v954
      %v987 = vmin.f32 %v971, %v955
      %v988 = vmin.f32 %v972, %v956
      %v989 = vmin.f32 %v973, %v957
      %v990 = vmin.f32 %v974, %v958
      %v991 = vmin.f32 %v975, %v959
      %v992 = vmin.f32 %v976, %v960
      %v993 = vmax.f32 %v979, %v977
      %v994 = vmax.f32 %v980, %v978
      %v995 = vmax.f32 %v981, %v977
      %v996 = vmax.f32 %v982, %v978
      %v997 = vmax.f32 %v983, %v979
      %v998 = vmax.f32 %v984, %v980
      %v999 = vmax.f32 %v985, %v981
      %v1000 = vmax.f32 %v986, %v982
      %v1001 = vmax.f32 %v987, %v983
      %v1002 = vmax.f32 %v988, %v984
      %v1003 = vmax.f32 %v989, %v985
      %v1004 = vmax.f32 %v990, %v986
      %v1005 = vmax.f32 %v991, %v987
      %v1006 = vmax.f32 %v992, %v988
      %v1007 = vmax.f32 %v991, %v989
      %v1008 = vmax.f32 %v992, %v990
      %v1009 = vmax.f32 %v977, %v993
      %v1010 = vmax.f32 %v978, %v994
      %v1011 = vmax.f32 %v979, %v995
      %v1012 = vmax.f32 %v980, %v996
      %v1013 = vmax.f32 %v981, %v997
      %v1014 = vmax.f32 %v982, %v998
      %v1015 = vmax.f32 %v983, %v999
      %v1016 = vmax.f32 %v984, %v1000
      %v1017 = vmax.f32 %v985, %v1001
      %v1018 = vmax.f32 %v986, %v1002
      %v1019 = vmax.f32 %v987, %v1003
      %v1020 = vmax.f32 %v988, %v1004
      %v1021 = vmax.f32 %v989, %v1005
      %v1022 = vmax.f32 %v990, %v1006
      %v1023 = vmax.f32 %v991, %v1007
      %v1024 = vmax.f32 %v992, %v1008
      %v1025 = vrot.slane %v1009, 1
      %v1026 = vrot.slane %v1011, 1
      %v1027 = vrot.slane %v1013, 1
      %v1028 = vrot.slane %v1015, 1
      %v1029 = vrot.slane %v1017, 1
      %v1030 = vrot.slane %v1019, 1
      %v1031 = vrot.slane %v1021, 1
      %v1032 = vrot.slane %v1023, 1
      %v1033 = vrot.slane %v1010, 1
      %v1034 = vrot.slane %v1012, 1
      %v1035 = vrot.slane %v1014, 1
      %v1036 = vrot.slane %v1016, 1
      %v1037 = vrot.slane %v1018, 1
      %v1038 = vrot.slane %v1020, 1
      %v1039 = vrot.slane %v1022, 1
      %v1040 = vrot.slane %v1024, 1
      %v1041 = vsel %vm89, %v1025, %v1033
      %v1042 = vsel %vm89, %v1026, %v1034
      %v1043 = vsel %vm89, %v1027, %v1035
      %v1044 = vsel %vm89, %v1028, %v1036
      %v1045 = vsel %vm89, %v1029, %v1037
      %v1046 = vsel %vm89, %v1030, %v1038
      %v1047 = vsel %vm89, %v1031, %v1039
      %v1048 = vsel %vm89, %v1032, %v1040
      %v1049 = vsel %vm89, %v1033, %v1025
      %v1050 = vsel %vm89, %v1034, %v1026
      %v1051 = vsel %vm89, %v1035, %v1027
      %v1052 = vsel %vm89, %v1036, %v1028
      %v1053 = vsel %vm89, %v1037, %v1029
      %v1054 = vsel %vm89, %v1038, %v1030
      %v1055 = vsel %vm89, %v1039, %v1031
      %v1056 = vsel %vm89, %v1040, %v1032
      %v1057 = vsub.f32 %v1041, %v51
      %v1058 = vsub.f32 %v1049, %v52
      %v1059 = vsub.f32 %v1042, %v51
      %v1060 = vsub.f32 %v1050, %v52
      %v1061 = vsub.f32 %v1043, %v51
      %v1062 = vsub.f32 %v1051, %v52
      %v1063 = vsub.f32 %v1044, %v51
      %v1064 = vsub.f32 %v1052, %v52
      %v1065 = vsub.f32 %v1045, %v51
      %v1066 = vsub.f32 %v1053, %v52
      %v1067 = vsub.f32 %v1046, %v51
      %v1068 = vsub.f32 %v1054, %v52
      %v1069 = vsub.f32 %v1047, %v51
      %v1070 = vsub.f32 %v1055, %v52
      %v1071 = vsub.f32 %v1048, %v51
      %v1072 = vsub.f32 %v1056, %v52
      %v1073 = vrot.slane %v1009, 7
      %v1074 = vrot.slane %v1011, 7
      %v1075 = vrot.slane %v1013, 7
      %v1076 = vrot.slane %v1015, 7
      %v1077 = vrot.slane %v1017, 7
      %v1078 = vrot.slane %v1019, 7
      %v1079 = vrot.slane %v1021, 7
      %v1080 = vrot.slane %v1023, 7
      %v1081 = vrot.slane %v1010, 7
      %v1082 = vrot.slane %v1012, 7
      %v1083 = vrot.slane %v1014, 7
      %v1084 = vrot.slane %v1016, 7
      %v1085 = vrot.slane %v1018, 7
      %v1086 = vrot.slane %v1020, 7
      %v1087 = vrot.slane %v1022, 7
      %v1088 = vrot.slane %v1024, 7
      %v1089 = vsel %vm138, %v1073, %v1081
      %v1090 = vsel %vm138, %v1074, %v1082
      %v1091 = vsel %vm138, %v1075, %v1083
      %v1092 = vsel %vm138, %v1076, %v1084
      %v1093 = vsel %vm138, %v1077, %v1085
      %v1094 = vsel %vm138, %v1078, %v1086
      %v1095 = vsel %vm138, %v1079, %v1087
      %v1096 = vsel %vm138, %v1080, %v1088
      %v1097 = vsel %vm138, %v1081, %v1073
      %v1098 = vsel %vm138, %v1082, %v1074
      %v1099 = vsel %vm138, %v1083, %v1075
      %v1100 = vsel %vm138, %v1084, %v1076
      %v1101 = vsel %vm138, %v1085, %v1077
      %v1102 = vsel %vm138, %v1086, %v1078
      %v1103 = vsel %vm138, %v1087, %v1079
      %v1104 = vsel %vm138, %v1088, %v1080
      %v1105 = vsub.f32 %v1097, %v55
      %v1106 = vsub.f32 %v1089, %v56
      %v1107 = vsub.f32 %v1098, %v55
      %v1108 = vsub.f32 %v1090, %v56
      %v1109 = vsub.f32 %v1099, %v55
      %v1110 = vsub.f32 %v1091, %v56
      %v1111 = vsub.f32 %v1100, %v55
      %v1112 = vsub.f32 %v1092, %v56
      %v1113 = vsub.f32 %v1101, %v55
      %v1114 = vsub.f32 %v1093, %v56
      %v1115 = vsub.f32 %v1102, %v55
      %v1116 = vsub.f32 %v1094, %v56
      %v1117 = vsub.f32 %v1103, %v55
      %v1118 = vsub.f32 %v1095, %v56
      %v1119 = vsub.f32 %v1104, %v55
      %v1120 = vsub.f32 %v1096, %v56
      %v1121 = vmax.f32 %v1057, %v1105
      %v1122 = vmax.f32 %v1058, %v1106
      %v1123 = vmax.f32 %v1059, %v1107
      %v1124 = vmax.f32 %v1060, %v1108
      %v1125 = vmax.f32 %v1061, %v1109
      %v1126 = vmax.f32 %v1062, %v1110
      %v1127 = vmax.f32 %v1063, %v1111
      %v1128 = vmax.f32 %v1064, %v1112
      %v1129 = vmax.f32 %v1065, %v1113
      %v1130 = vmax.f32 %v1066, %v1114
      %v1131 = vmax.f32 %v1067, %v1115
      %v1132 = vmax.f32 %v1068, %v1116
      %v1133 = vmax.f32 %v1069, %v1117
      %v1134 = vmax.f32 %v1070, %v1118
      %v1135 = vmax.f32 %v1071, %v1119
      %v1136 = vmax.f32 %v1072, %v1120
      %v1137 = vmax.f32 %v1009, %v1121
      %v1138 = vmax.f32 %v1010, %v1122
      %v1139 = vmax.f32 %v1011, %v1123
      %v1140 = vmax.f32 %v1012, %v1124
      %v1141 = vmax.f32 %v1013, %v1125
      %v1142 = vmax.f32 %v1014, %v1126
      %v1143 = vmax.f32 %v1015, %v1127
      %v1144 = vmax.f32 %v1016, %v1128
      %v1145 = vmax.f32 %v1017, %v1129
      %v1146 = vmax.f32 %v1018, %v1130
      %v1147 = vmax.f32 %v1019, %v1131
      %v1148 = vmax.f32 %v1020, %v1132
      %v1149 = vmax.f32 %v1021, %v1133
      %v1150 = vmax.f32 %v1022, %v1134
      %v1151 = vmax.f32 %v1023, %v1135
      %v1152 = vmax.f32 %v1024, %v1136
      %1153 = vrot.lane.b32.xlu0 %v1137, 127
      %v1154 = vpop.permute.xlu0 %1153
      %1155 = vrot.lane.b32.xlu0 %v1138, 127
      %v1156 = vpop.permute.xlu0 %1155
      %1157 = vrot.lane.b32.xlu0 %v1139, 127
      %v1158 = vpop.permute.xlu0 %1157
      %1159 = vrot.lane.b32.xlu0 %v1140, 127
      %v1160 = vpop.permute.xlu0 %1159
      %1161 = vrot.lane.b32.xlu0 %v1141, 127
      %v1162 = vpop.permute.xlu0 %1161
      %1163 = vrot.lane.b32.xlu0 %v1142, 127
      %v1164 = vpop.permute.xlu0 %1163
      %1165 = vrot.lane.b32.xlu0 %v1143, 127
      %v1166 = vpop.permute.xlu0 %1165
      %1167 = vrot.lane.b32.xlu0 %v1144, 127
      %v1168 = vpop.permute.xlu0 %1167
      %1169 = vrot.lane.b32.xlu0 %v1145, 127
      %v1170 = vpop.permute.xlu0 %1169
      %1171 = vrot.lane.b32.xlu0 %v1146, 127
      %v1172 = vpop.permute.xlu0 %1171
      %1173 = vrot.lane.b32.xlu0 %v1147, 127
      %v1174 = vpop.permute.xlu0 %1173
      %1175 = vrot.lane.b32.xlu0 %v1148, 127
      %v1176 = vpop.permute.xlu0 %1175
      %1177 = vrot.lane.b32.xlu0 %v1149, 127
      %v1178 = vpop.permute.xlu0 %1177
      %1179 = vrot.lane.b32.xlu0 %v1150, 127
      %v1180 = vpop.permute.xlu0 %1179
      %1181 = vrot.lane.b32.xlu0 %v1151, 127
      %v1182 = vpop.permute.xlu0 %1181
      %1183 = vrot.lane.b32.xlu0 %v1152, 127
      %v1184 = vpop.permute.xlu0 %1183
      %v1185 = vsub.f32 %v1154, %v46
      %v1186 = vsub.f32 %v1156, %v46
      %v1187 = vsub.f32 %v1158, %v46
      %v1188 = vsub.f32 %v1160, %v46
      %v1189 = vsub.f32 %v1162, %v46
      %v1190 = vsub.f32 %v1164, %v46
      %v1191 = vsub.f32 %v1166, %v46
      %v1192 = vsub.f32 %v1168, %v46
      %v1193 = vsub.f32 %v1170, %v46
      %v1194 = vsub.f32 %v1172, %v46
      %v1195 = vsub.f32 %v1174, %v46
      %v1196 = vsub.f32 %v1176, %v46
      %v1197 = vsub.f32 %v1178, %v46
      %v1198 = vsub.f32 %v1180, %v46
      %v1199 = vsub.f32 %v1182, %v46
      %v1200 = vsub.f32 %v1184, %v46
      %1201 = vrot.lane.b32.xlu0 %v1137, 1
      %v1202 = vpop.permute.xlu0 %1201
      %1203 = vrot.lane.b32.xlu0 %v1138, 1
      %v1204 = vpop.permute.xlu0 %1203
      %1205 = vrot.lane.b32.xlu0 %v1139, 1
      %v1206 = vpop.permute.xlu0 %1205
      %1207 = vrot.lane.b32.xlu0 %v1140, 1
      %v1208 = vpop.permute.xlu0 %1207
      %1209 = vrot.lane.b32.xlu0 %v1141, 1
      %v1210 = vpop.permute.xlu0 %1209
      %1211 = vrot.lane.b32.xlu0 %v1142, 1
      %v1212 = vpop.permute.xlu0 %1211
      %1213 = vrot.lane.b32.xlu0 %v1143, 1
      %v1214 = vpop.permute.xlu0 %1213
      %1215 = vrot.lane.b32.xlu0 %v1144, 1
      %v1216 = vpop.permute.xlu0 %1215
      %1217 = vrot.lane.b32.xlu0 %v1145, 1
      %v1218 = vpop.permute.xlu0 %1217
      %1219 = vrot.lane.b32.xlu0 %v1146, 1
      %v1220 = vpop.permute.xlu0 %1219
      %1221 = vrot.lane.b32.xlu0 %v1147, 1
      %v1222 = vpop.permute.xlu0 %1221
      %1223 = vrot.lane.b32.xlu0 %v1148, 1
      %v1224 = vpop.permute.xlu0 %1223
      %1225 = vrot.lane.b32.xlu0 %v1149, 1
      %v1226 = vpop.permute.xlu0 %1225
      %1227 = vrot.lane.b32.xlu0 %v1150, 1
      %v1228 = vpop.permute.xlu0 %1227
      %1229 = vrot.lane.b32.xlu0 %v1151, 1
      %v1230 = vpop.permute.xlu0 %1229
      %1231 = vrot.lane.b32.xlu0 %v1152, 1
      %v1232 = vpop.permute.xlu0 %1231
      %v1233 = vsub.f32 %v1202, %v48
      %v1234 = vsub.f32 %v1204, %v48
      %v1235 = vsub.f32 %v1206, %v48
      %v1236 = vsub.f32 %v1208, %v48
      %v1237 = vsub.f32 %v1210, %v48
      %v1238 = vsub.f32 %v1212, %v48
      %v1239 = vsub.f32 %v1214, %v48
      %v1240 = vsub.f32 %v1216, %v48
      %v1241 = vsub.f32 %v1218, %v48
      %v1242 = vsub.f32 %v1220, %v48
      %v1243 = vsub.f32 %v1222, %v48
      %v1244 = vsub.f32 %v1224, %v48
      %v1245 = vsub.f32 %v1226, %v48
      %v1246 = vsub.f32 %v1228, %v48
      %v1247 = vsub.f32 %v1230, %v48
      %v1248 = vsub.f32 %v1232, %v48
      %v1249 = vmax.f32 %v1185, %v1233
      %v1250 = vmax.f32 %v1186, %v1234
      %v1251 = vmax.f32 %v1187, %v1235
      %v1252 = vmax.f32 %v1188, %v1236
      %v1253 = vmax.f32 %v1189, %v1237
      %v1254 = vmax.f32 %v1190, %v1238
      %v1255 = vmax.f32 %v1191, %v1239
      %v1256 = vmax.f32 %v1192, %v1240
      %v1257 = vmax.f32 %v1193, %v1241
      %v1258 = vmax.f32 %v1194, %v1242
      %v1259 = vmax.f32 %v1195, %v1243
      %v1260 = vmax.f32 %v1196, %v1244
      %v1261 = vmax.f32 %v1197, %v1245
      %v1262 = vmax.f32 %v1198, %v1246
      %v1263 = vmax.f32 %v1199, %v1247
      %v1264 = vmax.f32 %v1200, %v1248
      %v1265 = vmax.f32 %v1137, %v1249
      %v1266 = vmax.f32 %v1138, %v1250
      %v1267 = vmax.f32 %v1139, %v1251
      %v1268 = vmax.f32 %v1140, %v1252
      %v1269 = vmax.f32 %v1141, %v1253
      %v1270 = vmax.f32 %v1142, %v1254
      %v1271 = vmax.f32 %v1143, %v1255
      %v1272 = vmax.f32 %v1144, %v1256
      %v1273 = vmax.f32 %v1145, %v1257
      %v1274 = vmax.f32 %v1146, %v1258
      %v1275 = vmax.f32 %v1147, %v1259
      %v1276 = vmax.f32 %v1148, %v1260
      %v1277 = vmax.f32 %v1149, %v1261
      %v1278 = vmax.f32 %v1150, %v1262
      %v1279 = vmax.f32 %v1151, %v1263
      %v1280 = vmax.f32 %v1152, %v1264
      %v1281 = vsub.f32 %v673, %v1265
      %v1282 = vsub.f32 %v674, %v1266
      %v1283 = vsub.f32 %v675, %v1267
      %v1284 = vsub.f32 %v676, %v1268
      %v1285 = vsub.f32 %v677, %v1269
      %v1286 = vsub.f32 %v678, %v1270
      %v1287 = vsub.f32 %v679, %v1271
      %v1288 = vsub.f32 %v680, %v1272
      %v1289 = vsub.f32 %v681, %v1273
      %v1290 = vsub.f32 %v682, %v1274
      %v1291 = vsub.f32 %v683, %v1275
      %v1292 = vsub.f32 %v684, %v1276
      %v1293 = vsub.f32 %v685, %v1277
      %v1294 = vsub.f32 %v686, %v1278
      %v1295 = vsub.f32 %v687, %v1279
      %v1296 = vsub.f32 %v688, %v1280
      %v1297 = vmax.f32 %v1281, 0.0
      %v1298 = vmax.f32 %v1282, 0.0
      %v1299 = vmax.f32 %v1283, 0.0
      %v1300 = vmax.f32 %v1284, 0.0
      %v1301 = vmax.f32 %v1285, 0.0
      %v1302 = vmax.f32 %v1286, 0.0
      %v1303 = vmax.f32 %v1287, 0.0
      %v1304 = vmax.f32 %v1288, 0.0
      %v1305 = vmax.f32 %v1289, 0.0
      %v1306 = vmax.f32 %v1290, 0.0
      %v1307 = vmax.f32 %v1291, 0.0
      %v1308 = vmax.f32 %v1292, 0.0
      %v1309 = vmax.f32 %v1293, 0.0
      %v1310 = vmax.f32 %v1294, 0.0
      %v1311 = vmax.f32 %v1295, 0.0
      %v1312 = vmax.f32 %v1296, 0.0
      %v1313 = vmul.f32 %v689, %v1297
      %v1314 = vmul.f32 %v690, %v1298
      %v1315 = vmul.f32 %v691, %v1299
      %v1316 = vmul.f32 %v692, %v1300
      %v1317 = vmul.f32 %v693, %v1301
      %v1318 = vmul.f32 %v694, %v1302
      %v1319 = vmul.f32 %v695, %v1303
      %v1320 = vmul.f32 %v696, %v1304
      %v1321 = vmul.f32 %v697, %v1305
      %v1322 = vmul.f32 %v698, %v1306
      %v1323 = vmul.f32 %v699, %v1307
      %v1324 = vmul.f32 %v700, %v1308
      %v1325 = vmul.f32 %v701, %v1309
      %v1326 = vmul.f32 %v702, %v1310
      %v1327 = vmul.f32 %v703, %v1311
      %v1328 = vmul.f32 %v704, %v1312
      %v1329 = vsub.f32 %v1297, %v1313
      %v1330 = vsub.f32 %v1298, %v1314
      %v1331 = vsub.f32 %v1299, %v1315
      %v1332 = vsub.f32 %v1300, %v1316
      %v1333 = vsub.f32 %v1301, %v1317
      %v1334 = vsub.f32 %v1302, %v1318
      %v1335 = vsub.f32 %v1303, %v1319
      %v1336 = vsub.f32 %v1304, %v1320
      %v1337 = vsub.f32 %v1305, %v1321
      %v1338 = vsub.f32 %v1306, %v1322
      %v1339 = vsub.f32 %v1307, %v1323
      %v1340 = vsub.f32 %v1308, %v1324
      %v1341 = vsub.f32 %v1309, %v1325
      %v1342 = vsub.f32 %v1310, %v1326
      %v1343 = vsub.f32 %v1311, %v1327
      %v1344 = vsub.f32 %v1312, %v1328
      %v1345 = vmax.f32 %v1329, 0.0
      %v1346 = vmax.f32 %v1330, 0.0
      %v1347 = vmax.f32 %v1331, 0.0
      %v1348 = vmax.f32 %v1332, 0.0
      %v1349 = vmax.f32 %v1333, 0.0
      %v1350 = vmax.f32 %v1334, 0.0
      %v1351 = vmax.f32 %v1335, 0.0
      %v1352 = vmax.f32 %v1336, 0.0
      %v1353 = vmax.f32 %v1337, 0.0
      %v1354 = vmax.f32 %v1338, 0.0
      %v1355 = vmax.f32 %v1339, 0.0
      %v1356 = vmax.f32 %v1340, 0.0
      %v1357 = vmax.f32 %v1341, 0.0
      %v1358 = vmax.f32 %v1342, 0.0
      %v1359 = vmax.f32 %v1343, 0.0
      %v1360 = vmax.f32 %v1344, 0.0
      %v1361 = vadd.f32 %v689, %v1345
      %v1362 = vadd.f32 %v690, %v1346
      %v1363 = vadd.f32 %v691, %v1347
      %v1364 = vadd.f32 %v692, %v1348
      %v1365 = vadd.f32 %v693, %v1349
      %v1366 = vadd.f32 %v694, %v1350
      %v1367 = vadd.f32 %v695, %v1351
      %v1368 = vadd.f32 %v696, %v1352
      %v1369 = vadd.f32 %v697, %v1353
      %v1370 = vadd.f32 %v698, %v1354
      %v1371 = vadd.f32 %v699, %v1355
      %v1372 = vadd.f32 %v700, %v1356
      %v1373 = vadd.f32 %v701, %v1357
      %v1374 = vadd.f32 %v702, %v1358
      %v1375 = vadd.f32 %v703, %v1359
      %v1376 = vadd.f32 %v704, %v1360
      %v1377 = vmin.f32 %v979, %v977
      %v1378 = vmin.f32 %v980, %v978
      %v1379 = vmin.f32 %v981, %v977
      %v1380 = vmin.f32 %v982, %v978
      %v1381 = vmin.f32 %v983, %v979
      %v1382 = vmin.f32 %v984, %v980
      %v1383 = vmin.f32 %v985, %v981
      %v1384 = vmin.f32 %v986, %v982
      %v1385 = vmin.f32 %v987, %v983
      %v1386 = vmin.f32 %v988, %v984
      %v1387 = vmin.f32 %v989, %v985
      %v1388 = vmin.f32 %v990, %v986
      %v1389 = vmin.f32 %v991, %v987
      %v1390 = vmin.f32 %v992, %v988
      %v1391 = vmin.f32 %v991, %v989
      %v1392 = vmin.f32 %v992, %v990
      %v1393 = vrot.slane %v977, 1
      %v1394 = vrot.slane %v979, 1
      %v1395 = vrot.slane %v981, 1
      %v1396 = vrot.slane %v983, 1
      %v1397 = vrot.slane %v985, 1
      %v1398 = vrot.slane %v987, 1
      %v1399 = vrot.slane %v989, 1
      %v1400 = vrot.slane %v991, 1
      %v1401 = vrot.slane %v978, 1
      %v1402 = vrot.slane %v980, 1
      %v1403 = vrot.slane %v982, 1
      %v1404 = vrot.slane %v984, 1
      %v1405 = vrot.slane %v986, 1
      %v1406 = vrot.slane %v988, 1
      %v1407 = vrot.slane %v990, 1
      %v1408 = vrot.slane %v992, 1
      %v1409 = vsel %vm89, %v1393, %v1401
      %v1410 = vsel %vm89, %v1394, %v1402
      %v1411 = vsel %vm89, %v1395, %v1403
      %v1412 = vsel %vm89, %v1396, %v1404
      %v1413 = vsel %vm89, %v1397, %v1405
      %v1414 = vsel %vm89, %v1398, %v1406
      %v1415 = vsel %vm89, %v1399, %v1407
      %v1416 = vsel %vm89, %v1400, %v1408
      %v1417 = vsel %vm89, %v1401, %v1393
      %v1418 = vsel %vm89, %v1402, %v1394
      %v1419 = vsel %vm89, %v1403, %v1395
      %v1420 = vsel %vm89, %v1404, %v1396
      %v1421 = vsel %vm89, %v1405, %v1397
      %v1422 = vsel %vm89, %v1406, %v1398
      %v1423 = vsel %vm89, %v1407, %v1399
      %v1424 = vsel %vm89, %v1408, %v1400
      %v1425 = vadd.f32 %v1409, %v51
      %v1426 = vadd.f32 %v1417, %v52
      %v1427 = vadd.f32 %v1410, %v51
      %v1428 = vadd.f32 %v1418, %v52
      %v1429 = vadd.f32 %v1411, %v51
      %v1430 = vadd.f32 %v1419, %v52
      %v1431 = vadd.f32 %v1412, %v51
      %v1432 = vadd.f32 %v1420, %v52
      %v1433 = vadd.f32 %v1413, %v51
      %v1434 = vadd.f32 %v1421, %v52
      %v1435 = vadd.f32 %v1414, %v51
      %v1436 = vadd.f32 %v1422, %v52
      %v1437 = vadd.f32 %v1415, %v51
      %v1438 = vadd.f32 %v1423, %v52
      %v1439 = vadd.f32 %v1416, %v51
      %v1440 = vadd.f32 %v1424, %v52
      %v1441 = vrot.slane %v977, 7
      %v1442 = vrot.slane %v979, 7
      %v1443 = vrot.slane %v981, 7
      %v1444 = vrot.slane %v983, 7
      %v1445 = vrot.slane %v985, 7
      %v1446 = vrot.slane %v987, 7
      %v1447 = vrot.slane %v989, 7
      %v1448 = vrot.slane %v991, 7
      %v1449 = vrot.slane %v978, 7
      %v1450 = vrot.slane %v980, 7
      %v1451 = vrot.slane %v982, 7
      %v1452 = vrot.slane %v984, 7
      %v1453 = vrot.slane %v986, 7
      %v1454 = vrot.slane %v988, 7
      %v1455 = vrot.slane %v990, 7
      %v1456 = vrot.slane %v992, 7
      %v1457 = vsel %vm138, %v1441, %v1449
      %v1458 = vsel %vm138, %v1442, %v1450
      %v1459 = vsel %vm138, %v1443, %v1451
      %v1460 = vsel %vm138, %v1444, %v1452
      %v1461 = vsel %vm138, %v1445, %v1453
      %v1462 = vsel %vm138, %v1446, %v1454
      %v1463 = vsel %vm138, %v1447, %v1455
      %v1464 = vsel %vm138, %v1448, %v1456
      %v1465 = vsel %vm138, %v1449, %v1441
      %v1466 = vsel %vm138, %v1450, %v1442
      %v1467 = vsel %vm138, %v1451, %v1443
      %v1468 = vsel %vm138, %v1452, %v1444
      %v1469 = vsel %vm138, %v1453, %v1445
      %v1470 = vsel %vm138, %v1454, %v1446
      %v1471 = vsel %vm138, %v1455, %v1447
      %v1472 = vsel %vm138, %v1456, %v1448
      %v1473 = vadd.f32 %v1465, %v55
      %v1474 = vadd.f32 %v1457, %v56
      %v1475 = vadd.f32 %v1466, %v55
      %v1476 = vadd.f32 %v1458, %v56
      %v1477 = vadd.f32 %v1467, %v55
      %v1478 = vadd.f32 %v1459, %v56
      %v1479 = vadd.f32 %v1468, %v55
      %v1480 = vadd.f32 %v1460, %v56
      %v1481 = vadd.f32 %v1469, %v55
      %v1482 = vadd.f32 %v1461, %v56
      %v1483 = vadd.f32 %v1470, %v55
      %v1484 = vadd.f32 %v1462, %v56
      %v1485 = vadd.f32 %v1471, %v55
      %v1486 = vadd.f32 %v1463, %v56
      %v1487 = vadd.f32 %v1472, %v55
      %v1488 = vadd.f32 %v1464, %v56
      %v1489 = vmin.f32 %v1425, %v1473
      %v1490 = vmin.f32 %v1426, %v1474
      %v1491 = vmin.f32 %v1427, %v1475
      %v1492 = vmin.f32 %v1428, %v1476
      %v1493 = vmin.f32 %v1429, %v1477
      %v1494 = vmin.f32 %v1430, %v1478
      %v1495 = vmin.f32 %v1431, %v1479
      %v1496 = vmin.f32 %v1432, %v1480
      %v1497 = vmin.f32 %v1433, %v1481
      %v1498 = vmin.f32 %v1434, %v1482
      %v1499 = vmin.f32 %v1435, %v1483
      %v1500 = vmin.f32 %v1436, %v1484
      %v1501 = vmin.f32 %v1437, %v1485
      %v1502 = vmin.f32 %v1438, %v1486
      %v1503 = vmin.f32 %v1439, %v1487
      %v1504 = vmin.f32 %v1440, %v1488
      %1505 = vrot.lane.b32.xlu0 %v977, 127
      %v1506 = vpop.permute.xlu0 %1505
      %1507 = vrot.lane.b32.xlu0 %v978, 127
      %v1508 = vpop.permute.xlu0 %1507
      %1509 = vrot.lane.b32.xlu0 %v979, 127
      %v1510 = vpop.permute.xlu0 %1509
      %1511 = vrot.lane.b32.xlu0 %v980, 127
      %v1512 = vpop.permute.xlu0 %1511
      %1513 = vrot.lane.b32.xlu0 %v981, 127
      %v1514 = vpop.permute.xlu0 %1513
      %1515 = vrot.lane.b32.xlu0 %v982, 127
      %v1516 = vpop.permute.xlu0 %1515
      %1517 = vrot.lane.b32.xlu0 %v983, 127
      %v1518 = vpop.permute.xlu0 %1517
      %1519 = vrot.lane.b32.xlu0 %v984, 127
      %v1520 = vpop.permute.xlu0 %1519
      %1521 = vrot.lane.b32.xlu0 %v985, 127
      %v1522 = vpop.permute.xlu0 %1521
      %1523 = vrot.lane.b32.xlu0 %v986, 127
      %v1524 = vpop.permute.xlu0 %1523
      %1525 = vrot.lane.b32.xlu0 %v987, 127
      %v1526 = vpop.permute.xlu0 %1525
      %1527 = vrot.lane.b32.xlu0 %v988, 127
      %v1528 = vpop.permute.xlu0 %1527
      %1529 = vrot.lane.b32.xlu0 %v989, 127
      %v1530 = vpop.permute.xlu0 %1529
      %1531 = vrot.lane.b32.xlu0 %v990, 127
      %v1532 = vpop.permute.xlu0 %1531
      %1533 = vrot.lane.b32.xlu0 %v991, 127
      %v1534 = vpop.permute.xlu0 %1533
      %1535 = vrot.lane.b32.xlu0 %v992, 127
      %v1536 = vpop.permute.xlu0 %1535
      %v1537 = vadd.f32 %v1506, %v46
      %v1538 = vadd.f32 %v1508, %v46
      %v1539 = vadd.f32 %v1510, %v46
      %v1540 = vadd.f32 %v1512, %v46
      %v1541 = vadd.f32 %v1514, %v46
      %v1542 = vadd.f32 %v1516, %v46
      %v1543 = vadd.f32 %v1518, %v46
      %v1544 = vadd.f32 %v1520, %v46
      %v1545 = vadd.f32 %v1522, %v46
      %v1546 = vadd.f32 %v1524, %v46
      %v1547 = vadd.f32 %v1526, %v46
      %v1548 = vadd.f32 %v1528, %v46
      %v1549 = vadd.f32 %v1530, %v46
      %v1550 = vadd.f32 %v1532, %v46
      %v1551 = vadd.f32 %v1534, %v46
      %v1552 = vadd.f32 %v1536, %v46
      %1553 = vrot.lane.b32.xlu0 %v977, 1
      %v1554 = vpop.permute.xlu0 %1553
      %1555 = vrot.lane.b32.xlu0 %v978, 1
      %v1556 = vpop.permute.xlu0 %1555
      %1557 = vrot.lane.b32.xlu0 %v979, 1
      %v1558 = vpop.permute.xlu0 %1557
      %1559 = vrot.lane.b32.xlu0 %v980, 1
      %v1560 = vpop.permute.xlu0 %1559
      %1561 = vrot.lane.b32.xlu0 %v981, 1
      %v1562 = vpop.permute.xlu0 %1561
      %1563 = vrot.lane.b32.xlu0 %v982, 1
      %v1564 = vpop.permute.xlu0 %1563
      %1565 = vrot.lane.b32.xlu0 %v983, 1
      %v1566 = vpop.permute.xlu0 %1565
      %1567 = vrot.lane.b32.xlu0 %v984, 1
      %v1568 = vpop.permute.xlu0 %1567
      %1569 = vrot.lane.b32.xlu0 %v985, 1
      %v1570 = vpop.permute.xlu0 %1569
      %1571 = vrot.lane.b32.xlu0 %v986, 1
      %v1572 = vpop.permute.xlu0 %1571
      %1573 = vrot.lane.b32.xlu0 %v987, 1
      %v1574 = vpop.permute.xlu0 %1573
      %1575 = vrot.lane.b32.xlu0 %v988, 1
      %v1576 = vpop.permute.xlu0 %1575
      %1577 = vrot.lane.b32.xlu0 %v989, 1
      %v1578 = vpop.permute.xlu0 %1577
      %1579 = vrot.lane.b32.xlu0 %v990, 1
      %v1580 = vpop.permute.xlu0 %1579
      %1581 = vrot.lane.b32.xlu0 %v991, 1
      %v1582 = vpop.permute.xlu0 %1581
      %1583 = vrot.lane.b32.xlu0 %v992, 1
      %v1584 = vpop.permute.xlu0 %1583
      %v1585 = vadd.f32 %v1554, %v48
      %v1586 = vadd.f32 %v1556, %v48
      %v1587 = vadd.f32 %v1558, %v48
      %v1588 = vadd.f32 %v1560, %v48
      %v1589 = vadd.f32 %v1562, %v48
      %v1590 = vadd.f32 %v1564, %v48
      %v1591 = vadd.f32 %v1566, %v48
      %v1592 = vadd.f32 %v1568, %v48
      %v1593 = vadd.f32 %v1570, %v48
      %v1594 = vadd.f32 %v1572, %v48
      %v1595 = vadd.f32 %v1574, %v48
      %v1596 = vadd.f32 %v1576, %v48
      %v1597 = vadd.f32 %v1578, %v48
      %v1598 = vadd.f32 %v1580, %v48
      %v1599 = vadd.f32 %v1582, %v48
      %v1600 = vadd.f32 %v1584, %v48
      %v1601 = vmin.f32 %v1537, %v1585
      %v1602 = vmin.f32 %v1538, %v1586
      %v1603 = vmin.f32 %v1539, %v1587
      %v1604 = vmin.f32 %v1540, %v1588
      %v1605 = vmin.f32 %v1541, %v1589
      %v1606 = vmin.f32 %v1542, %v1590
      %v1607 = vmin.f32 %v1543, %v1591
      %v1608 = vmin.f32 %v1544, %v1592
      %v1609 = vmin.f32 %v1545, %v1593
      %v1610 = vmin.f32 %v1546, %v1594
      %v1611 = vmin.f32 %v1547, %v1595
      %v1612 = vmin.f32 %v1548, %v1596
      %v1613 = vmin.f32 %v1549, %v1597
      %v1614 = vmin.f32 %v1550, %v1598
      %v1615 = vmin.f32 %v1551, %v1599
      %v1616 = vmin.f32 %v1552, %v1600
      %v1617 = vmin.f32 %v1601, %v977
      %v1618 = vmin.f32 %v1602, %v978
      %v1619 = vmin.f32 %v1603, %v979
      %v1620 = vmin.f32 %v1604, %v980
      %v1621 = vmin.f32 %v1605, %v981
      %v1622 = vmin.f32 %v1606, %v982
      %v1623 = vmin.f32 %v1607, %v983
      %v1624 = vmin.f32 %v1608, %v984
      %v1625 = vmin.f32 %v1609, %v985
      %v1626 = vmin.f32 %v1610, %v986
      %v1627 = vmin.f32 %v1611, %v987
      %v1628 = vmin.f32 %v1612, %v988
      %v1629 = vmin.f32 %v1613, %v989
      %v1630 = vmin.f32 %v1614, %v990
      %v1631 = vmin.f32 %v1615, %v991
      %v1632 = vmin.f32 %v1616, %v992
      %v1633 = vmin.f32 %v1377, %v1489
      %v1634 = vmin.f32 %v1378, %v1490
      %v1635 = vmin.f32 %v1379, %v1491
      %v1636 = vmin.f32 %v1380, %v1492
      %v1637 = vmin.f32 %v1381, %v1493
      %v1638 = vmin.f32 %v1382, %v1494
      %v1639 = vmin.f32 %v1383, %v1495
      %v1640 = vmin.f32 %v1384, %v1496
      %v1641 = vmin.f32 %v1385, %v1497
      %v1642 = vmin.f32 %v1386, %v1498
      %v1643 = vmin.f32 %v1387, %v1499
      %v1644 = vmin.f32 %v1388, %v1500
      %v1645 = vmin.f32 %v1389, %v1501
      %v1646 = vmin.f32 %v1390, %v1502
      %v1647 = vmin.f32 %v1391, %v1503
      %v1648 = vmin.f32 %v1392, %v1504
      %v1649 = vmin.f32 %v1633, %v1617
      %v1650 = vmin.f32 %v1634, %v1618
      %v1651 = vmin.f32 %v1635, %v1619
      %v1652 = vmin.f32 %v1636, %v1620
      %v1653 = vmin.f32 %v1637, %v1621
      %v1654 = vmin.f32 %v1638, %v1622
      %v1655 = vmin.f32 %v1639, %v1623
      %v1656 = vmin.f32 %v1640, %v1624
      %v1657 = vmin.f32 %v1641, %v1625
      %v1658 = vmin.f32 %v1642, %v1626
      %v1659 = vmin.f32 %v1643, %v1627
      %v1660 = vmin.f32 %v1644, %v1628
      %v1661 = vmin.f32 %v1645, %v1629
      %v1662 = vmin.f32 %v1646, %v1630
      %v1663 = vmin.f32 %v1647, %v1631
      %v1664 = vmin.f32 %v1648, %v1632
      %v1665 = vmax.f32 %v1651, %v1649
      %v1666 = vmax.f32 %v1652, %v1650
      %v1667 = vmax.f32 %v1653, %v1649
      %v1668 = vmax.f32 %v1654, %v1650
      %v1669 = vmax.f32 %v1655, %v1651
      %v1670 = vmax.f32 %v1656, %v1652
      %v1671 = vmax.f32 %v1657, %v1653
      %v1672 = vmax.f32 %v1658, %v1654
      %v1673 = vmax.f32 %v1659, %v1655
      %v1674 = vmax.f32 %v1660, %v1656
      %v1675 = vmax.f32 %v1661, %v1657
      %v1676 = vmax.f32 %v1662, %v1658
      %v1677 = vmax.f32 %v1663, %v1659
      %v1678 = vmax.f32 %v1664, %v1660
      %v1679 = vmax.f32 %v1663, %v1661
      %v1680 = vmax.f32 %v1664, %v1662
      %v1681 = vmax.f32 %v1649, %v1665
      %v1682 = vmax.f32 %v1650, %v1666
      %v1683 = vmax.f32 %v1651, %v1667
      %v1684 = vmax.f32 %v1652, %v1668
      %v1685 = vmax.f32 %v1653, %v1669
      %v1686 = vmax.f32 %v1654, %v1670
      %v1687 = vmax.f32 %v1655, %v1671
      %v1688 = vmax.f32 %v1656, %v1672
      %v1689 = vmax.f32 %v1657, %v1673
      %v1690 = vmax.f32 %v1658, %v1674
      %v1691 = vmax.f32 %v1659, %v1675
      %v1692 = vmax.f32 %v1660, %v1676
      %v1693 = vmax.f32 %v1661, %v1677
      %v1694 = vmax.f32 %v1662, %v1678
      %v1695 = vmax.f32 %v1663, %v1679
      %v1696 = vmax.f32 %v1664, %v1680
      %v1697 = vrot.slane %v1681, 1
      %v1698 = vrot.slane %v1683, 1
      %v1699 = vrot.slane %v1685, 1
      %v1700 = vrot.slane %v1687, 1
      %v1701 = vrot.slane %v1689, 1
      %v1702 = vrot.slane %v1691, 1
      %v1703 = vrot.slane %v1693, 1
      %v1704 = vrot.slane %v1695, 1
      %v1705 = vrot.slane %v1682, 1
      %v1706 = vrot.slane %v1684, 1
      %v1707 = vrot.slane %v1686, 1
      %v1708 = vrot.slane %v1688, 1
      %v1709 = vrot.slane %v1690, 1
      %v1710 = vrot.slane %v1692, 1
      %v1711 = vrot.slane %v1694, 1
      %v1712 = vrot.slane %v1696, 1
      %v1713 = vsel %vm89, %v1697, %v1705
      %v1714 = vsel %vm89, %v1698, %v1706
      %v1715 = vsel %vm89, %v1699, %v1707
      %v1716 = vsel %vm89, %v1700, %v1708
      %v1717 = vsel %vm89, %v1701, %v1709
      %v1718 = vsel %vm89, %v1702, %v1710
      %v1719 = vsel %vm89, %v1703, %v1711
      %v1720 = vsel %vm89, %v1704, %v1712
      %v1721 = vsel %vm89, %v1705, %v1697
      %v1722 = vsel %vm89, %v1706, %v1698
      %v1723 = vsel %vm89, %v1707, %v1699
      %v1724 = vsel %vm89, %v1708, %v1700
      %v1725 = vsel %vm89, %v1709, %v1701
      %v1726 = vsel %vm89, %v1710, %v1702
      %v1727 = vsel %vm89, %v1711, %v1703
      %v1728 = vsel %vm89, %v1712, %v1704
      %v1729 = vsub.f32 %v1713, %v51
      %v1730 = vsub.f32 %v1721, %v52
      %v1731 = vsub.f32 %v1714, %v51
      %v1732 = vsub.f32 %v1722, %v52
      %v1733 = vsub.f32 %v1715, %v51
      %v1734 = vsub.f32 %v1723, %v52
      %v1735 = vsub.f32 %v1716, %v51
      %v1736 = vsub.f32 %v1724, %v52
      %v1737 = vsub.f32 %v1717, %v51
      %v1738 = vsub.f32 %v1725, %v52
      %v1739 = vsub.f32 %v1718, %v51
      %v1740 = vsub.f32 %v1726, %v52
      %v1741 = vsub.f32 %v1719, %v51
      %v1742 = vsub.f32 %v1727, %v52
      %v1743 = vsub.f32 %v1720, %v51
      %v1744 = vsub.f32 %v1728, %v52
      %v1745 = vrot.slane %v1681, 7
      %v1746 = vrot.slane %v1683, 7
      %v1747 = vrot.slane %v1685, 7
      %v1748 = vrot.slane %v1687, 7
      %v1749 = vrot.slane %v1689, 7
      %v1750 = vrot.slane %v1691, 7
      %v1751 = vrot.slane %v1693, 7
      %v1752 = vrot.slane %v1695, 7
      %v1753 = vrot.slane %v1682, 7
      %v1754 = vrot.slane %v1684, 7
      %v1755 = vrot.slane %v1686, 7
      %v1756 = vrot.slane %v1688, 7
      %v1757 = vrot.slane %v1690, 7
      %v1758 = vrot.slane %v1692, 7
      %v1759 = vrot.slane %v1694, 7
      %v1760 = vrot.slane %v1696, 7
      %v1761 = vsel %vm138, %v1745, %v1753
      %v1762 = vsel %vm138, %v1746, %v1754
      %v1763 = vsel %vm138, %v1747, %v1755
      %v1764 = vsel %vm138, %v1748, %v1756
      %v1765 = vsel %vm138, %v1749, %v1757
      %v1766 = vsel %vm138, %v1750, %v1758
      %v1767 = vsel %vm138, %v1751, %v1759
      %v1768 = vsel %vm138, %v1752, %v1760
      %v1769 = vsel %vm138, %v1753, %v1745
      %v1770 = vsel %vm138, %v1754, %v1746
      %v1771 = vsel %vm138, %v1755, %v1747
      %v1772 = vsel %vm138, %v1756, %v1748
      %v1773 = vsel %vm138, %v1757, %v1749
      %v1774 = vsel %vm138, %v1758, %v1750
      %v1775 = vsel %vm138, %v1759, %v1751
      %v1776 = vsel %vm138, %v1760, %v1752
      %v1777 = vsub.f32 %v1769, %v55
      %v1778 = vsub.f32 %v1761, %v56
      %v1779 = vsub.f32 %v1770, %v55
      %v1780 = vsub.f32 %v1762, %v56
      %v1781 = vsub.f32 %v1771, %v55
      %v1782 = vsub.f32 %v1763, %v56
      %v1783 = vsub.f32 %v1772, %v55
      %v1784 = vsub.f32 %v1764, %v56
      %v1785 = vsub.f32 %v1773, %v55
      %v1786 = vsub.f32 %v1765, %v56
      %v1787 = vsub.f32 %v1774, %v55
      %v1788 = vsub.f32 %v1766, %v56
      %v1789 = vsub.f32 %v1775, %v55
      %v1790 = vsub.f32 %v1767, %v56
      %v1791 = vsub.f32 %v1776, %v55
      %v1792 = vsub.f32 %v1768, %v56
      %v1793 = vmax.f32 %v1729, %v1777
      %v1794 = vmax.f32 %v1730, %v1778
      %v1795 = vmax.f32 %v1731, %v1779
      %v1796 = vmax.f32 %v1732, %v1780
      %v1797 = vmax.f32 %v1733, %v1781
      %v1798 = vmax.f32 %v1734, %v1782
      %v1799 = vmax.f32 %v1735, %v1783
      %v1800 = vmax.f32 %v1736, %v1784
      %v1801 = vmax.f32 %v1737, %v1785
      %v1802 = vmax.f32 %v1738, %v1786
      %v1803 = vmax.f32 %v1739, %v1787
      %v1804 = vmax.f32 %v1740, %v1788
      %v1805 = vmax.f32 %v1741, %v1789
      %v1806 = vmax.f32 %v1742, %v1790
      %v1807 = vmax.f32 %v1743, %v1791
      %v1808 = vmax.f32 %v1744, %v1792
      %v1809 = vmax.f32 %v1681, %v1793
      %v1810 = vmax.f32 %v1682, %v1794
      %v1811 = vmax.f32 %v1683, %v1795
      %v1812 = vmax.f32 %v1684, %v1796
      %v1813 = vmax.f32 %v1685, %v1797
      %v1814 = vmax.f32 %v1686, %v1798
      %v1815 = vmax.f32 %v1687, %v1799
      %v1816 = vmax.f32 %v1688, %v1800
      %v1817 = vmax.f32 %v1689, %v1801
      %v1818 = vmax.f32 %v1690, %v1802
      %v1819 = vmax.f32 %v1691, %v1803
      %v1820 = vmax.f32 %v1692, %v1804
      %v1821 = vmax.f32 %v1693, %v1805
      %v1822 = vmax.f32 %v1694, %v1806
      %v1823 = vmax.f32 %v1695, %v1807
      %v1824 = vmax.f32 %v1696, %v1808
      %1825 = vrot.lane.b32.xlu0 %v1809, 127
      %v1826 = vpop.permute.xlu0 %1825
      %1827 = vrot.lane.b32.xlu0 %v1810, 127
      %v1828 = vpop.permute.xlu0 %1827
      %1829 = vrot.lane.b32.xlu0 %v1811, 127
      %v1830 = vpop.permute.xlu0 %1829
      %1831 = vrot.lane.b32.xlu0 %v1812, 127
      %v1832 = vpop.permute.xlu0 %1831
      %1833 = vrot.lane.b32.xlu0 %v1813, 127
      %v1834 = vpop.permute.xlu0 %1833
      %1835 = vrot.lane.b32.xlu0 %v1814, 127
      %v1836 = vpop.permute.xlu0 %1835
      %1837 = vrot.lane.b32.xlu0 %v1815, 127
      %v1838 = vpop.permute.xlu0 %1837
      %1839 = vrot.lane.b32.xlu0 %v1816, 127
      %v1840 = vpop.permute.xlu0 %1839
      %1841 = vrot.lane.b32.xlu0 %v1817, 127
      %v1842 = vpop.permute.xlu0 %1841
      %1843 = vrot.lane.b32.xlu0 %v1818, 127
      %v1844 = vpop.permute.xlu0 %1843
      %1845 = vrot.lane.b32.xlu0 %v1819, 127
      %v1846 = vpop.permute.xlu0 %1845
      %1847 = vrot.lane.b32.xlu0 %v1820, 127
      %v1848 = vpop.permute.xlu0 %1847
      %1849 = vrot.lane.b32.xlu0 %v1821, 127
      %v1850 = vpop.permute.xlu0 %1849
      %1851 = vrot.lane.b32.xlu0 %v1822, 127
      %v1852 = vpop.permute.xlu0 %1851
      %1853 = vrot.lane.b32.xlu0 %v1823, 127
      %v1854 = vpop.permute.xlu0 %1853
      %1855 = vrot.lane.b32.xlu0 %v1824, 127
      %v1856 = vpop.permute.xlu0 %1855
      %v1857 = vsub.f32 %v1826, %v46
      %v1858 = vsub.f32 %v1828, %v46
      %v1859 = vsub.f32 %v1830, %v46
      %v1860 = vsub.f32 %v1832, %v46
      %v1861 = vsub.f32 %v1834, %v46
      %v1862 = vsub.f32 %v1836, %v46
      %v1863 = vsub.f32 %v1838, %v46
      %v1864 = vsub.f32 %v1840, %v46
      %v1865 = vsub.f32 %v1842, %v46
      %v1866 = vsub.f32 %v1844, %v46
      %v1867 = vsub.f32 %v1846, %v46
      %v1868 = vsub.f32 %v1848, %v46
      %v1869 = vsub.f32 %v1850, %v46
      %v1870 = vsub.f32 %v1852, %v46
      %v1871 = vsub.f32 %v1854, %v46
      %v1872 = vsub.f32 %v1856, %v46
      %1873 = vrot.lane.b32.xlu0 %v1809, 1
      %v1874 = vpop.permute.xlu0 %1873
      %1875 = vrot.lane.b32.xlu0 %v1810, 1
      %v1876 = vpop.permute.xlu0 %1875
      %1877 = vrot.lane.b32.xlu0 %v1811, 1
      %v1878 = vpop.permute.xlu0 %1877
      %1879 = vrot.lane.b32.xlu0 %v1812, 1
      %v1880 = vpop.permute.xlu0 %1879
      %1881 = vrot.lane.b32.xlu0 %v1813, 1
      %v1882 = vpop.permute.xlu0 %1881
      %1883 = vrot.lane.b32.xlu0 %v1814, 1
      %v1884 = vpop.permute.xlu0 %1883
      %1885 = vrot.lane.b32.xlu0 %v1815, 1
      %v1886 = vpop.permute.xlu0 %1885
      %1887 = vrot.lane.b32.xlu0 %v1816, 1
      %v1888 = vpop.permute.xlu0 %1887
      %1889 = vrot.lane.b32.xlu0 %v1817, 1
      %v1890 = vpop.permute.xlu0 %1889
      %1891 = vrot.lane.b32.xlu0 %v1818, 1
      %v1892 = vpop.permute.xlu0 %1891
      %1893 = vrot.lane.b32.xlu0 %v1819, 1
      %v1894 = vpop.permute.xlu0 %1893
      %1895 = vrot.lane.b32.xlu0 %v1820, 1
      %v1896 = vpop.permute.xlu0 %1895
      %1897 = vrot.lane.b32.xlu0 %v1821, 1
      %v1898 = vpop.permute.xlu0 %1897
      %1899 = vrot.lane.b32.xlu0 %v1822, 1
      %v1900 = vpop.permute.xlu0 %1899
      %1901 = vrot.lane.b32.xlu0 %v1823, 1
      %v1902 = vpop.permute.xlu0 %1901
      %1903 = vrot.lane.b32.xlu0 %v1824, 1
      %v1904 = vpop.permute.xlu0 %1903
      %v1905 = vsub.f32 %v1874, %v48
      %v1906 = vsub.f32 %v1876, %v48
      %v1907 = vsub.f32 %v1878, %v48
      %v1908 = vsub.f32 %v1880, %v48
      %v1909 = vsub.f32 %v1882, %v48
      %v1910 = vsub.f32 %v1884, %v48
      %v1911 = vsub.f32 %v1886, %v48
      %v1912 = vsub.f32 %v1888, %v48
      %v1913 = vsub.f32 %v1890, %v48
      %v1914 = vsub.f32 %v1892, %v48
      %v1915 = vsub.f32 %v1894, %v48
      %v1916 = vsub.f32 %v1896, %v48
      %v1917 = vsub.f32 %v1898, %v48
      %v1918 = vsub.f32 %v1900, %v48
      %v1919 = vsub.f32 %v1902, %v48
      %v1920 = vsub.f32 %v1904, %v48
      %v1921 = vmax.f32 %v1857, %v1905
      %v1922 = vmax.f32 %v1858, %v1906
      %v1923 = vmax.f32 %v1859, %v1907
      %v1924 = vmax.f32 %v1860, %v1908
      %v1925 = vmax.f32 %v1861, %v1909
      %v1926 = vmax.f32 %v1862, %v1910
      %v1927 = vmax.f32 %v1863, %v1911
      %v1928 = vmax.f32 %v1864, %v1912
      %v1929 = vmax.f32 %v1865, %v1913
      %v1930 = vmax.f32 %v1866, %v1914
      %v1931 = vmax.f32 %v1867, %v1915
      %v1932 = vmax.f32 %v1868, %v1916
      %v1933 = vmax.f32 %v1869, %v1917
      %v1934 = vmax.f32 %v1870, %v1918
      %v1935 = vmax.f32 %v1871, %v1919
      %v1936 = vmax.f32 %v1872, %v1920
      %v1937 = vmax.f32 %v1809, %v1921
      %v1938 = vmax.f32 %v1810, %v1922
      %v1939 = vmax.f32 %v1811, %v1923
      %v1940 = vmax.f32 %v1812, %v1924
      %v1941 = vmax.f32 %v1813, %v1925
      %v1942 = vmax.f32 %v1814, %v1926
      %v1943 = vmax.f32 %v1815, %v1927
      %v1944 = vmax.f32 %v1816, %v1928
      %v1945 = vmax.f32 %v1817, %v1929
      %v1946 = vmax.f32 %v1818, %v1930
      %v1947 = vmax.f32 %v1819, %v1931
      %v1948 = vmax.f32 %v1820, %v1932
      %v1949 = vmax.f32 %v1821, %v1933
      %v1950 = vmax.f32 %v1822, %v1934
      %v1951 = vmax.f32 %v1823, %v1935
      %v1952 = vmax.f32 %v1824, %v1936
      %v1953 = vsub.f32 %v977, %v1937
      %v1954 = vsub.f32 %v978, %v1938
      %v1955 = vsub.f32 %v979, %v1939
      %v1956 = vsub.f32 %v980, %v1940
      %v1957 = vsub.f32 %v981, %v1941
      %v1958 = vsub.f32 %v982, %v1942
      %v1959 = vsub.f32 %v983, %v1943
      %v1960 = vsub.f32 %v984, %v1944
      %v1961 = vsub.f32 %v985, %v1945
      %v1962 = vsub.f32 %v986, %v1946
      %v1963 = vsub.f32 %v987, %v1947
      %v1964 = vsub.f32 %v988, %v1948
      %v1965 = vsub.f32 %v989, %v1949
      %v1966 = vsub.f32 %v990, %v1950
      %v1967 = vsub.f32 %v991, %v1951
      %v1968 = vsub.f32 %v992, %v1952
      %v1969 = vmax.f32 %v1953, 0.0
      %v1970 = vmax.f32 %v1954, 0.0
      %v1971 = vmax.f32 %v1955, 0.0
      %v1972 = vmax.f32 %v1956, 0.0
      %v1973 = vmax.f32 %v1957, 0.0
      %v1974 = vmax.f32 %v1958, 0.0
      %v1975 = vmax.f32 %v1959, 0.0
      %v1976 = vmax.f32 %v1960, 0.0
      %v1977 = vmax.f32 %v1961, 0.0
      %v1978 = vmax.f32 %v1962, 0.0
      %v1979 = vmax.f32 %v1963, 0.0
      %v1980 = vmax.f32 %v1964, 0.0
      %v1981 = vmax.f32 %v1965, 0.0
      %v1982 = vmax.f32 %v1966, 0.0
      %v1983 = vmax.f32 %v1967, 0.0
      %v1984 = vmax.f32 %v1968, 0.0
      %v1985 = vmul.f32 %v1361, %v1969
      %v1986 = vmul.f32 %v1362, %v1970
      %v1987 = vmul.f32 %v1363, %v1971
      %v1988 = vmul.f32 %v1364, %v1972
      %v1989 = vmul.f32 %v1365, %v1973
      %v1990 = vmul.f32 %v1366, %v1974
      %v1991 = vmul.f32 %v1367, %v1975
      %v1992 = vmul.f32 %v1368, %v1976
      %v1993 = vmul.f32 %v1369, %v1977
      %v1994 = vmul.f32 %v1370, %v1978
      %v1995 = vmul.f32 %v1371, %v1979
      %v1996 = vmul.f32 %v1372, %v1980
      %v1997 = vmul.f32 %v1373, %v1981
      %v1998 = vmul.f32 %v1374, %v1982
      %v1999 = vmul.f32 %v1375, %v1983
      %v2000 = vmul.f32 %v1376, %v1984
      %v2001 = vsub.f32 %v1969, %v1985
      %v2002 = vsub.f32 %v1970, %v1986
      %v2003 = vsub.f32 %v1971, %v1987
      %v2004 = vsub.f32 %v1972, %v1988
      %v2005 = vsub.f32 %v1973, %v1989
      %v2006 = vsub.f32 %v1974, %v1990
      %v2007 = vsub.f32 %v1975, %v1991
      %v2008 = vsub.f32 %v1976, %v1992
      %v2009 = vsub.f32 %v1977, %v1993
      %v2010 = vsub.f32 %v1978, %v1994
      %v2011 = vsub.f32 %v1979, %v1995
      %v2012 = vsub.f32 %v1980, %v1996
      %v2013 = vsub.f32 %v1981, %v1997
      %v2014 = vsub.f32 %v1982, %v1998
      %v2015 = vsub.f32 %v1983, %v1999
      %v2016 = vsub.f32 %v1984, %v2000
      %v2017 = vmax.f32 %v2001, 0.0
      %v2018 = vmax.f32 %v2002, 0.0
      %v2019 = vmax.f32 %v2003, 0.0
      %v2020 = vmax.f32 %v2004, 0.0
      %v2021 = vmax.f32 %v2005, 0.0
      %v2022 = vmax.f32 %v2006, 0.0
      %v2023 = vmax.f32 %v2007, 0.0
      %v2024 = vmax.f32 %v2008, 0.0
      %v2025 = vmax.f32 %v2009, 0.0
      %v2026 = vmax.f32 %v2010, 0.0
      %v2027 = vmax.f32 %v2011, 0.0
      %v2028 = vmax.f32 %v2012, 0.0
      %v2029 = vmax.f32 %v2013, 0.0
      %v2030 = vmax.f32 %v2014, 0.0
      %v2031 = vmax.f32 %v2015, 0.0
      %v2032 = vmax.f32 %v2016, 0.0
      %v2033 = vadd.f32 %v1361, %v2017
      %v2034 = vadd.f32 %v1362, %v2018
      %v2035 = vadd.f32 %v1363, %v2019
      %v2036 = vadd.f32 %v1364, %v2020
      %v2037 = vadd.f32 %v1365, %v2021
      %v2038 = vadd.f32 %v1366, %v2022
      %v2039 = vadd.f32 %v1367, %v2023
      %v2040 = vadd.f32 %v1368, %v2024
      %v2041 = vadd.f32 %v1369, %v2025
      %v2042 = vadd.f32 %v1370, %v2026
      %v2043 = vadd.f32 %v1371, %v2027
      %v2044 = vadd.f32 %v1372, %v2028
      %v2045 = vadd.f32 %v1373, %v2029
      %v2046 = vadd.f32 %v1374, %v2030
      %v2047 = vadd.f32 %v1375, %v2031
      %v2048 = vadd.f32 %v1376, %v2032
    $region14: #{tpu_custom_call.1} parent=1 // loop_footer
      %s672 = sadd.s32 1, %s668
    $region15: #{tpu_custom_call.1} parent=1 // loop_footer_branch
      %667 = sbr.rel target = $region11
    $region16: #{tpu_custom_call.1} parent=1 // loop_exit
      _
    %2049 = vst [vmem:[#allocation5] sm:$0xff] %v689
    %2050 = vst [vmem:[#allocation5 + $0x8] sm:$0xff] %v690
    %2051 = vst [vmem:[#allocation5 + $0x10] sm:$0xff] %v691
    %2052 = vst [vmem:[#allocation5 + $0x18] sm:$0xff] %v692
    %2053 = vst [vmem:[#allocation5 + $0x20] sm:$0xff] %v693
    %2054 = vst [vmem:[#allocation5 + $0x28] sm:$0xff] %v694
    %2055 = vst [vmem:[#allocation5 + $0x30] sm:$0xff] %v695
    %2056 = vst [vmem:[#allocation5 + $0x38] sm:$0xff] %v696
    %2057 = vst [vmem:[#allocation5 + $0x40] sm:$0xff] %v697
    %2058 = vst [vmem:[#allocation5 + $0x48] sm:$0xff] %v698
    %2059 = vst [vmem:[#allocation5 + $0x50] sm:$0xff] %v699
    %2060 = vst [vmem:[#allocation5 + $0x58] sm:$0xff] %v700
    %2061 = vst [vmem:[#allocation5 + $0x60] sm:$0xff] %v701
    %2062 = vst [vmem:[#allocation5 + $0x68] sm:$0xff] %v702
    %2063 = vst [vmem:[#allocation5 + $0x70] sm:$0xff] %v703
    %2064 = vst [vmem:[#allocation5 + $0x78] sm:$0xff] %v704
    // Predicated region
    $region17: #{tpu_custom_call.1} parent=1 // pred_check
      _
    $region18: #{tpu_custom_call.1} parent=1 // pred_check_branch
      %2066 = sbr.rel (0) target = $region20
    $region19: #{tpu_custom_call.1} parent=1 // pred_region
      %s2068 = ssub.s32 2048, 2048
      %2069 = vsyncadd [#allocation4], %s2068
      %s2070 = sshll.u32 [#allocation5], 4
      %s2071 = int_to_ptr.vmem [resolvable:$true] %s2070
      %2076 = dma.vmem_to_hbm [thread:$0]  %s2071, 2048, %s1, [#allocation4], 128, 128, 8
    $region20: #{tpu_custom_call.1} parent=1 // pred_fallthru
      _
    // Predicated region
    $region21: #{tpu_custom_call.1} parent=1 // pred_check
      _
    $region22: #{tpu_custom_call.1} parent=1 // pred_check_branch
      %2078 = sbr.rel (0) target = $region24
    $region23: #{tpu_custom_call.1} parent=1 // pred_region
      %2079 = dma.done [#allocation4], 2048
    $region24: #{tpu_custom_call.1} parent=1 // pred_fallthru
      _
    %2080 = vsyncpa [#allocation3], 1
    %2081 = vsyncpa [#allocation4], 1

</llo_original>
